<compile_context>
chip_gen: v7x
topology: tpu7x:2x2x1
jax: 0.10.0
libtpu: 0.0.40
codegen_flags: <defaults>
</compile_context>

<pallas_src>
import jax
import jax.numpy as jnp
from jax import lax
from jax.experimental import pallas as pl
from jax.experimental.pallas import tpu as pltpu


def _round_up(x, m):
    return (x + m - 1) // m * m


def _fm_kernel(emb_ref, lr_ref, sel_ref, bias_ref, out_ref):
    """One batch tile of the FM forward.

    emb_ref:  (TB, F*D)  native dtype -- flattened field embeddings
    lr_ref:   (TB, F)    native dtype -- gathered 1-dim LR embeddings
    sel_ref:  (F*D, DP)  native dtype -- static 0/1 selection matrix
                                         sel[f*D + d, d] = 1, zero elsewhere
    bias_ref: (1,)       float32 in SMEM
    out_ref:  (TB, 1)    float32
    """
    emb = emb_ref[...]                       # native dtype (bf16 stays bf16)
    sel = sel_ref[...]

    # MXU: per-dim field sum and per-dim field sum-of-squares (f32 accumulation).
    fs = jnp.dot(emb, sel,
                 preferred_element_type=jnp.float32,
                 precision=lax.Precision.HIGHEST)          # (TB, DP)
    sqp = jnp.dot(emb * emb, sel,
                  preferred_element_type=jnp.float32,
                  precision=lax.Precision.HIGHEST)         # (TB, DP)

    # Bi-interaction: 0.5 * sum_d[(sum_f e)^2 - sum_f e^2]; padded lanes are 0.
    bi = 0.5 * jnp.sum(fs * fs - sqp, axis=-1, keepdims=True)   # (TB, 1)

    # LR part: sum over fields of the 1-dim embeddings + bias (SMEM scalar).
    lr = lr_ref[...].astype(jnp.float32)
    lr_out = jnp.sum(lr, axis=-1, keepdims=True) + bias_ref[0]  # (TB, 1)

    out_ref[...] = (bi + lr_out).astype(out_ref.dtype)


def _choose_batch_tile(batch_rows, num_fields, embed_dim, itemsize,
                       target_tile_bytes=6 << 20):
    """Pick TB so one (TB, F*D) emb tile is a few MiB.

    ~6 MiB keeps the per-step DMA (~4 us on v6e) well above the ~0.35 us grid
    overhead while the double-buffered resident set + temporaries stays under
    ~35 MiB (fits v7x's 64 MiB physical VMEM with room to spare).
    """
    row_bytes = max(1, num_fields * embed_dim * itemsize)
    tb = max(128, (target_tile_bytes // row_bytes) // 128 * 128)
    if batch_rows <= tb:
        return batch_rows            # single block covering the whole batch
    return tb


def fm_layer_forward(X, feature_emb, lr_table, bias):
    """FM_Layer.forward(X, feature_emb).

    X:           [B, F] int32 global indices into the LR embedding table
    feature_emb: [B, F, D] floats (f32 or bf16; streamed in native dtype)
    lr_table:    [vocab, 1] floats (LR_Layer's 1-dim embedding table)
    bias:        scalar float
    returns:     [B, 1] float32
    """
    B, F, D = feature_emb.shape
    itemsize = feature_emb.dtype.itemsize

    # Glue (plain JAX): embedding gather for the logistic-regression term.
    lr_emb = jnp.take(lr_table[:, 0], X, axis=0)           # (B, F), native dtype

    # Lane-dense view of the embeddings (free: contiguous in HBM).
    emb_flat = feature_emb.reshape(B, F * D)

    # Tiny batches (< 8 rows) get a cheap pad to one sublane group; everything
    # else streams un-padded and the last grid block is ragged (OOB rows are
    # independent garbage whose writes Pallas drops).
    B_rows = B
    if B < 8:
        B_rows = 8
        emb_flat = jnp.pad(emb_flat, ((0, B_rows - B), (0, 0)))
        lr_emb = jnp.pad(lr_emb, ((0, B_rows - B), (0, 0)))

    TB = _choose_batch_tile(B_rows, F, D, itemsize)
    grid = (pl.cdiv(B_rows, TB),)

    # Static 0/1 selection matrix: sel[f*D + d, c] = 1 iff c == d (c < DP).
    DP = _round_up(D, 128)
    sel = (jnp.arange(F * D)[:, None] % D
           == jnp.arange(DP)[None, :]).astype(feature_emb.dtype)

    bias_arr = jnp.asarray(bias, jnp.float32).reshape(1)

    # Explicit VMEM budget: 2x double-buffered inputs + small constants +
    # in-kernel temporaries (emb*emb tile, three (TB, DP) f32 buffers) + slack.
    emb_tile = TB * F * D * itemsize
    lr_tile = TB * F * itemsize
    sel_bytes = F * D * DP * itemsize
    out_tile = TB * 4
    tmp_bytes = emb_tile + 3 * TB * DP * 4
    resident = 2 * (emb_tile + lr_tile + sel_bytes + out_tile) + tmp_bytes
    vmem_limit = int(min(max(resident + (6 << 20), 16 << 20), 48 << 20))

    out = pl.pallas_call(
        _fm_kernel,
        out_shape=jax.ShapeDtypeStruct((B_rows, 1), jnp.float32),
        grid=grid,
        in_specs=[
            pl.BlockSpec((TB, F * D), lambda i: (i, 0)),      # feature_emb tile
            pl.BlockSpec((TB, F), lambda i: (i, 0)),          # LR embeddings tile
            pl.BlockSpec((F * D, DP), lambda i: (0, 0)),      # selection matrix (VMEM-resident)
            pl.BlockSpec(memory_space=pltpu.MemorySpace.SMEM),  # bias scalar
        ],
        out_specs=pl.BlockSpec((TB, 1), lambda i: (i, 0)),
        compiler_params=pltpu.CompilerParams(
            dimension_semantics=("parallel",),                # megacore split
            vmem_limit_bytes=vmem_limit,
        ),
    )(emb_flat, lr_emb, sel, bias_arr)

    return out[:B] if B_rows != B else out


def fm_layer_reference(X, feature_emb, lr_table, bias):
    lr_emb = jnp.take(lr_table, X, axis=0)                  # (B, F, 1)
    lr_out = lr_emb.sum(axis=1) + bias                      # (B, 1)
    fe = feature_emb.astype(jnp.float32)
    sum_f = fe.sum(axis=1)
    bi = 0.5 * ((sum_f ** 2) - (fe ** 2).sum(axis=1))
    dot_sum = bi.sum(axis=-1, keepdims=True)                # (B, 1)
    return dot_sum + lr_out


if __name__ == "__main__":
    key = jax.random.PRNGKey(0)
    k1, k2, k3, k4 = jax.random.split(key, 4)

    B = 2          # batch
    F = 8          # num_fields
    D = 32         # embedding dim
    VOCAB = 64     # total vocab across fields (global indices)

    X = jax.random.randint(k1, (B, F), 0, VOCAB, dtype=jnp.int32)
    feature_emb = jax.random.normal(k2, (B, F, D), dtype=jnp.float32)
    # Deterministic parameter init (synthetic; not loaded from checkpoint).
    lr_table = 0.01 * jax.random.normal(k3, (VOCAB, 1), dtype=jnp.float32)
    bias = jnp.float32(0.0)    # nn.Parameter(torch.zeros(1))

    out = fm_layer_forward(X, feature_emb, lr_table, bias)
    out = jax.block_until_ready(out)

    ref = fm_layer_reference(X, feature_emb, lr_table, bias)
    assert out.shape == (B, 1), out.shape
    assert jnp.allclose(out, ref, atol=1e-4, rtol=1e-4), (out, ref)

    print("KERNEL_OK")
</pallas_src>

<mosaic_0001>
module attributes {stable_mosaic.version = 11 : i64} {
  func.func @_fm_kernel(%arg0: i32, %arg1: memref<8x256xf32, #tpu.memory_space<vmem>>, %arg2: memref<8x8xf32, #tpu.memory_space<vmem>>, %arg3: memref<256x128xf32, #tpu.memory_space<vmem>>, %arg4: memref<1xf32, #tpu.memory_space<smem>>, %arg5: memref<8x1xf32, #tpu.memory_space<vmem>>) attributes {dimension_semantics = [#tpu.dimension_semantics<parallel>], iteration_bounds = array<i64: 1>, scalar_prefetch = 0 : i64, scratch_operands = 0 : i64, tpu.core_type = #tpu.core_type<tc>, window_params = [{transform_indices = @transform_0, window_bounds = array<i64: 8, 256>}, {transform_indices = @transform_1, window_bounds = array<i64: 8, 8>}, {pipeline_mode = #tpu.pipeline_mode<synchronous>, transform_indices = @transform_2, window_bounds = array<i64: 256, 128>}, {transform_indices = @transform_3, window_bounds = array<i64: 1>}, {transform_indices = @transform_4, window_bounds = array<i64: 8, 1>}]} {
    %c0 = arith.constant 0 : index
    %c0_0 = arith.constant 0 : index
    %0 = vector.load %arg1[%c0, %c0_0] : memref<8x256xf32, #tpu.memory_space<vmem>>, vector<8x256xf32>
    %c0_1 = arith.constant 0 : index
    %c0_2 = arith.constant 0 : index
    %1 = vector.load %arg3[%c0_1, %c0_2] : memref<256x128xf32, #tpu.memory_space<vmem>>, vector<256x128xf32>
    %cst = arith.constant dense<0.000000e+00> : vector<8x128xf32>
    %2 = tpu.matmul %0, %1, %cst {dimension_numbers = #tpu.dot_dimension_numbers<[1], [0], [0], [1], [0, 0, 1, 1], [], []>, precision = #tpu.contract_precision<fp32>} : vector<8x256xf32>, vector<256x128xf32>, vector<8x128xf32> -> vector<8x128xf32>
    %3 = arith.mulf %0, %0 : vector<8x256xf32>
    %cst_3 = arith.constant dense<0.000000e+00> : vector<8x128xf32>
    %4 = tpu.matmul %3, %1, %cst_3 {dimension_numbers = #tpu.dot_dimension_numbers<[1], [0], [0], [1], [0, 0, 1, 1], [], []>, precision = #tpu.contract_precision<fp32>} : vector<8x256xf32>, vector<256x128xf32>, vector<8x128xf32> -> vector<8x128xf32>
    %5 = arith.mulf %2, %2 : vector<8x128xf32>
    %6 = arith.subf %5, %4 : vector<8x128xf32>
    %cst_4 = arith.constant dense<0.000000e+00> : vector<8xf32>
    %7 = vector.multi_reduction <add>, %6, %cst_4 [1] : vector<8x128xf32> to vector<8xf32>
    %8 = vector.shape_cast %7 : vector<8xf32> to vector<8x1xf32>
    %cst_5 = arith.constant 5.000000e-01 : f32
    %9 = vector.broadcast %cst_5 : f32 to vector<8x1xf32>
    %10 = arith.mulf %9, %8 : vector<8x1xf32>
    %c0_6 = arith.constant 0 : index
    %c0_7 = arith.constant 0 : index
    %11 = vector.load %arg2[%c0_6, %c0_7] : memref<8x8xf32, #tpu.memory_space<vmem>>, vector<8x8xf32>
    %cst_8 = arith.constant dense<0.000000e+00> : vector<8xf32>
    %12 = vector.multi_reduction <add>, %11, %cst_8 [1] : vector<8x8xf32> to vector<8xf32>
    %13 = vector.shape_cast %12 : vector<8xf32> to vector<8x1xf32>
    %c0_9 = arith.constant 0 : index
    %14 = memref.load %arg4[%c0_9] : memref<1xf32, #tpu.memory_space<smem>>
    %15 = vector.broadcast %14 : f32 to vector<8x1xf32>
    %16 = arith.addf %13, %15 : vector<8x1xf32>
    %17 = arith.addf %10, %16 : vector<8x1xf32>
    %c0_10 = arith.constant 0 : index
    %c0_11 = arith.constant 0 : index
    %18 = vector.load %arg5[%c0_10, %c0_11] : memref<8x1xf32, #tpu.memory_space<vmem>>, vector<8x1xf32>
    tpu.vector_store %arg5[%c0_10, %c0_11], %17 {strides = array<i32>} : memref<8x1xf32, #tpu.memory_space<vmem>>, vector<8x1xf32>,
    return
  }
  func.func @transform_0(%arg0: i32) -> (i32, i32) {
    %c0_i32 = arith.constant 0 : i32
    %c0_i32_0 = arith.constant 0 : i32
    return %arg0, %c0_i32 : i32, i32
  }
  func.func @transform_1(%arg0: i32) -> (i32, i32) {
    %c0_i32 = arith.constant 0 : i32
    %c0_i32_0 = arith.constant 0 : i32
    return %arg0, %c0_i32 : i32, i32
  }
  func.func @transform_2(%arg0: i32) -> (i32, i32) {
    %c0_i32 = arith.constant 0 : i32
    %c0_i32_0 = arith.constant 0 : i32
    %c0_i32_1 = arith.constant 0 : i32
    return %c0_i32, %c0_i32_0 : i32, i32
  }
  func.func @transform_3(%arg0: i32) -> i32 {
    %c0_i32 = arith.constant 0 : i32
    %c0_i32_0 = arith.constant 0 : i32
    return %c0_i32 : i32
  }
  func.func @transform_4(%arg0: i32) -> (i32, i32) {
    %c0_i32 = arith.constant 0 : i32
    %c0_i32_0 = arith.constant 0 : i32
    return %arg0, %c0_i32 : i32, i32
  }
}

</mosaic_0001>

<llo_original>
// kernel: tpu_custom_call.1
$region0: #{tpu_custom_call.1}
  #allocation0 [shape = 'u32[]', space=smem, size = 0x4, offset = 0x4, fixed_abs, tag = 'smem constant byte address 0x4 - core index']
  #allocation1 [shape = 'u32[144,128]{1,0:T(1,128)}', space=vmem, size = 0x12000, scoped, tag = 'internal scratch']
  #allocation2 [shape = 'f32[1]{0:T(128)S(6)}', space=smem, size = 0x200, scoped, tag = 'scoped memory for tpu_custom_call.1']
  %s0 = inlined_call_operand.hbm [shape: f32[8,256], index: 0, kind: input, shape index: {}]
  %s1 = inlined_call_operand.hbm [shape: f32[8,8], index: 1, kind: input, shape index: {}]
  %s2 = inlined_call_operand.hbm [shape: f32[256,128], index: 2, kind: input, shape index: {}]
  %s3 = inlined_call_operand.<no memory space> [shape: f32[1], index: 3, kind: input, shape index: {}]
  %s4 = inlined_call_operand.vmem [shape: f32[8,1], index: 4, kind: output, shape index: {}]
  %s5 = sld [smem:[#allocation0]]
  $region38: #{tpu_custom_call.1} parent=0
    _
  %s7 = ssub.s32 1, %s5
  %s8 = scalar_select 0, %s7, %s5
  %9 = sst [smem:[#allocation2]] %s3
  $region1: #{tpu_custom_call.1} parent=0
    #allocation3 [shape = 'u8[8192]{0}', space=vmem, size = 0x2000, scoped, tag = 'input window, operand 0, single buffered']
    #allocation4 [shape = 's32[1]{0}', space=sflag, size = 0x4, scoped, tag = 'scoped memory for tpu_custom_call.1']
    #allocation5 [shape = 'u8[4096]{0}', space=vmem, size = 0x1000, scoped, tag = 'input window, operand 1, single buffered']
    #allocation6 [shape = 's32[1]{0}', space=sflag, size = 0x4, scoped, tag = 'scoped memory for tpu_custom_call.1']
    #allocation7 [shape = 'u8[131072]{0}', space=vmem, size = 0x20000, scoped, tag = 'input window, operand 2, single buffered']
    %10 = vsyncpa [#allocation4], 0
    %11 = vsyncpa [#allocation6], 0
    // Predicated region
    $region2: #{tpu_custom_call.1} parent=1 // pred_check
      _
    $region3: #{tpu_custom_call.1} parent=1 // pred_check_branch
      %13 = sbr.rel (0) target = $region5
    $region4: #{tpu_custom_call.1} parent=1 // pred_region
      %s15 = ssub.s32 256, 256
      %16 = vsyncadd [#allocation4], %s15
      %s18 = sshll.u32 [#allocation3], 4
      %s19 = int_to_ptr.vmem [resolvable:$true] %s18
      %21 = dma.hbm_to_vmem [thread:$0]  %s0, 256, %s19, [#allocation4]
    $region5: #{tpu_custom_call.1} parent=1 // pred_fallthru
      _
    // Predicated region
    $region6: #{tpu_custom_call.1} parent=1 // pred_check
      _
    $region7: #{tpu_custom_call.1} parent=1 // pred_check_branch
      %23 = sbr.rel (0) target = $region9
    $region8: #{tpu_custom_call.1} parent=1 // pred_region
      %s25 = ssub.s32 128, 128
      %26 = vsyncadd [#allocation6], %s25
      %s28 = sshll.u32 [#allocation5], 4
      %s29 = int_to_ptr.vmem [resolvable:$true] %s28
      %31 = dma.hbm_to_vmem [thread:$0]  %s1, 128, %s29, [#allocation6]
    $region9: #{tpu_custom_call.1} parent=1 // pred_fallthru
      _
    // Predicated region
    $region10: #{tpu_custom_call.1} parent=1 // pred_check
      _
    $region11: #{tpu_custom_call.1} parent=1 // pred_check_branch
      %33 = sbr.rel (0) target = $region13
    $region12: #{tpu_custom_call.1} parent=1 // pred_region
      %s35 = ssub.s32 4096, 4096
      %36 = vsyncadd [#allocation6], %s35
      %s37 = sshll.u32 [#allocation7], 4
      %s38 = int_to_ptr.vmem [resolvable:$true] %s37
      %43 = dma.hbm_to_vmem [thread:$0]  %s2, 4096, %s38, [#allocation6], 128, 128, 8
    $region13: #{tpu_custom_call.1} parent=1 // pred_fallthru
      _
    // Predicated region
    $region14: #{tpu_custom_call.1} parent=1 // pred_check
      _
    $region15: #{tpu_custom_call.1} parent=1 // pred_check_branch
      %45 = sbr.rel (0) target = $region17
    $region16: #{tpu_custom_call.1} parent=1 // pred_region
      _
    $region17: #{tpu_custom_call.1} parent=1 // pred_fallthru
      _
    // Predicated region
    $region18: #{tpu_custom_call.1} parent=1 // pred_check
      _
    $region19: #{tpu_custom_call.1} parent=1 // pred_check_branch
      %47 = sbr.rel (0) target = $region21
    $region20: #{tpu_custom_call.1} parent=1 // pred_region
      %48 = dma.done [#allocation4], 256
    $region21: #{tpu_custom_call.1} parent=1 // pred_fallthru
      _
    // Predicated region
    $region22: #{tpu_custom_call.1} parent=1 // pred_check
      _
    $region23: #{tpu_custom_call.1} parent=1 // pred_check_branch
      %50 = sbr.rel (0) target = $region25
    $region24: #{tpu_custom_call.1} parent=1 // pred_region
      %51 = dma.done [#allocation6], 128
    $region25: #{tpu_custom_call.1} parent=1 // pred_fallthru
      _
    // Predicated region
    $region26: #{tpu_custom_call.1} parent=1 // pred_check
      _
    $region27: #{tpu_custom_call.1} parent=1 // pred_check_branch
      %53 = sbr.rel (0) target = $region29
    $region28: #{tpu_custom_call.1} parent=1 // pred_region
      %54 = dma.done [#allocation6], 4096
    $region29: #{tpu_custom_call.1} parent=1 // pred_fallthru
      _
    %v55 = vld [vmem:[#allocation3] sm:$0xff]
    %v56 = vld [vmem:[#allocation3 + $0x8] sm:$0xff]
    %v57 = vld [vmem:[#allocation7] sm:$0xff]
    %v58 = vld [vmem:[#allocation7 + $0x8] sm:$0xff]
    %v59 = vld [vmem:[#allocation7 + $0x10] sm:$0xff]
    %v60 = vld [vmem:[#allocation7 + $0x18] sm:$0xff]
    %v61 = vld [vmem:[#allocation7 + $0x20] sm:$0xff]
    %v62 = vld [vmem:[#allocation7 + $0x28] sm:$0xff]
    %v63 = vld [vmem:[#allocation7 + $0x30] sm:$0xff]
    %v64 = vld [vmem:[#allocation7 + $0x38] sm:$0xff]
    %v65 = vld [vmem:[#allocation7 + $0x40] sm:$0xff]
    %v66 = vld [vmem:[#allocation7 + $0x48] sm:$0xff]
    %v67 = vld [vmem:[#allocation7 + $0x50] sm:$0xff]
    %v68 = vld [vmem:[#allocation7 + $0x58] sm:$0xff]
    %v69 = vld [vmem:[#allocation7 + $0x60] sm:$0xff]
    %v70 = vld [vmem:[#allocation7 + $0x68] sm:$0xff]
    %v71 = vld [vmem:[#allocation7 + $0x70] sm:$0xff]
    %v72 = vld [vmem:[#allocation7 + $0x78] sm:$0xff]
    %v73 = vld [vmem:[#allocation7 + $0x80] sm:$0xff]
    %v74 = vld [vmem:[#allocation7 + $0x88] sm:$0xff]
    %v75 = vld [vmem:[#allocation7 + $0x90] sm:$0xff]
    %v76 = vld [vmem:[#allocation7 + $0x98] sm:$0xff]
    %v77 = vld [vmem:[#allocation7 + $0xa0] sm:$0xff]
    %v78 = vld [vmem:[#allocation7 + $0xa8] sm:$0xff]
    %v79 = vld [vmem:[#allocation7 + $0xb0] sm:$0xff]
    %v80 = vld [vmem:[#allocation7 + $0xb8] sm:$0xff]
    %v81 = vld [vmem:[#allocation7 + $0xc0] sm:$0xff]
    %v82 = vld [vmem:[#allocation7 + $0xc8] sm:$0xff]
    %v83 = vld [vmem:[#allocation7 + $0xd0] sm:$0xff]
    %v84 = vld [vmem:[#allocation7 + $0xd8] sm:$0xff]
    %v85 = vld [vmem:[#allocation7 + $0xe0] sm:$0xff]
    %v86 = vld [vmem:[#allocation7 + $0xe8] sm:$0xff]
    %v87 = vld [vmem:[#allocation7 + $0xf0] sm:$0xff]
    %v88 = vld [vmem:[#allocation7 + $0xf8] sm:$0xff]
    %89 = vmatprep.subr.mxu0 0.0
    %v90 = vand.u32 %v57, 4294901760
    %91 = vmatpush1.msra.mxu0 %v90
    %92 = vmatprep.subr.mxu0 0.0
    %v93 = vand.u32 %v58, 4294901760
    %94 = vmatpush1.msra.mxu0 %v93
    %95 = vmatprep.subr.mxu0 0.0
    %v96 = vand.u32 %v59, 4294901760
    %97 = vmatpush1.msra.mxu0 %v96
    %98 = vmatprep.subr.mxu0 0.0
    %v99 = vand.u32 %v60, 4294901760
    %100 = vmatpush1.msra.mxu0 %v99
    %101 = vmatprep.subr.mxu0 0.0
    %v102 = vand.u32 %v61, 4294901760
    %103 = vmatpush1.msra.mxu0 %v102
    %104 = vmatprep.subr.mxu0 0.0
    %v105 = vand.u32 %v62, 4294901760
    %106 = vmatpush1.msra.mxu0 %v105
    %107 = vmatprep.subr.mxu0 0.0
    %v108 = vand.u32 %v63, 4294901760
    %109 = vmatpush1.msra.mxu0 %v108
    %110 = vmatprep.subr.mxu0 0.0
    %v111 = vand.u32 %v64, 4294901760
    %112 = vmatpush1.msra.mxu0 %v111
    %113 = vmatprep.subr.mxu0 0.0
    %v114 = vand.u32 %v65, 4294901760
    %115 = vmatpush1.msra.mxu0 %v114
    %116 = vmatprep.subr.mxu0 0.0
    %v117 = vand.u32 %v66, 4294901760
    %118 = vmatpush1.msra.mxu0 %v117
    %119 = vmatprep.subr.mxu0 0.0
    %v120 = vand.u32 %v67, 4294901760
    %121 = vmatpush1.msra.mxu0 %v120
    %122 = vmatprep.subr.mxu0 0.0
    %v123 = vand.u32 %v68, 4294901760
    %124 = vmatpush1.msra.mxu0 %v123
    %125 = vmatprep.subr.mxu0 0.0
    %v126 = vand.u32 %v69, 4294901760
    %127 = vmatpush1.msra.mxu0 %v126
    %128 = vmatprep.subr.mxu0 0.0
    %v129 = vand.u32 %v70, 4294901760
    %130 = vmatpush1.msra.mxu0 %v129
    %131 = vmatprep.subr.mxu0 0.0
    %v132 = vand.u32 %v71, 4294901760
    %133 = vmatpush1.msra.mxu0 %v132
    %134 = vmatprep.subr.mxu0 0.0
    %v135 = vand.u32 %v72, 4294901760
    %136 = vmatpush1.msra.mxu0 %v135
    %137 = vmatprep.subr.mxu0 0.0
    %v138 = vand.u32 %v73, 4294901760
    %139 = vmatpush1.msra.mxu0 %v138
    %140 = vmatprep.subr.mxu0 0.0
    %v141 = vand.u32 %v74, 4294901760
    %142 = vmatpush1.msra.mxu0 %v141
    %143 = vmatprep.subr.mxu0 0.0
    %v144 = vand.u32 %v75, 4294901760
    %145 = vmatpush1.msra.mxu0 %v144
    %146 = vmatprep.subr.mxu0 0.0
    %v147 = vand.u32 %v76, 4294901760
    %148 = vmatpush1.msra.mxu0 %v147
    %149 = vmatprep.subr.mxu0 0.0
    %v150 = vand.u32 %v77, 4294901760
    %151 = vmatpush1.msra.mxu0 %v150
    %152 = vmatprep.subr.mxu0 0.0
    %v153 = vand.u32 %v78, 4294901760
    %154 = vmatpush1.msra.mxu0 %v153
    %155 = vmatprep.subr.mxu0 0.0
    %v156 = vand.u32 %v79, 4294901760
    %157 = vmatpush1.msra.mxu0 %v156
    %158 = vmatprep.subr.mxu0 0.0
    %v159 = vand.u32 %v80, 4294901760
    %160 = vmatpush1.msra.mxu0 %v159
    %161 = vmatprep.subr.mxu0 0.0
    %v162 = vand.u32 %v81, 4294901760
    %163 = vmatpush1.msra.mxu0 %v162
    %164 = vmatprep.subr.mxu0 0.0
    %v165 = vand.u32 %v82, 4294901760
    %166 = vmatpush1.msra.mxu0 %v165
    %167 = vmatprep.subr.mxu0 0.0
    %v168 = vand.u32 %v83, 4294901760
    %169 = vmatpush1.msra.mxu0 %v168
    %170 = vmatprep.subr.mxu0 0.0
    %v171 = vand.u32 %v84, 4294901760
    %172 = vmatpush1.msra.mxu0 %v171
    %173 = vmatprep.subr.mxu0 0.0
    %v174 = vand.u32 %v85, 4294901760
    %175 = vmatpush1.msra.mxu0 %v174
    %176 = vmatprep.subr.mxu0 0.0
    %v177 = vand.u32 %v86, 4294901760
    %178 = vmatpush1.msra.mxu0 %v177
    %179 = vmatprep.subr.mxu0 0.0
    %v180 = vand.u32 %v87, 4294901760
    %181 = vmatpush1.msra.mxu0 %v180
    %182 = vmatprep.subr.mxu0 0.0
    %v183 = vand.u32 %v88, 4294901760
    %184 = vmatpush1.msra.mxu0 %v183
    %v185 = vand.u32 %v56, 4294901760
    %v186 = vsub.f32 %v56, %v185
    %v187 = vand.u32 %v186, 4294901760
    %v188 = vsub.f32 %v186, %v187
    %v189 = vand.u32 %v188, 4294901760
    %190 = vmatprep.mubr.f32.mxu0 %v189
    %v191 = vand.u32 %v55, 4294901760
    %v192 = vsub.f32 %v55, %v191
    %v193 = vand.u32 %v192, 4294901760
    %v194 = vsub.f32 %v192, %v193
    %v195 = vand.u32 %v194, 4294901760
    %196 = vmatmul.mubr.f32.gmra.mrb[0].mxu0 %v195
    %v197 = vpop.f32.mrb[0].mxu0
    %v198 = vadd.f32 0.0, %v197
    %v199 = vpop.f32.mrb[0].mxu0
    %200 = vdwg.mxu0
    %201 = vmatprep.subr.mxu0 0.0
    %v202 = vand.u32 %v57, 4294901760
    %v203 = vsub.f32 %v57, %v202
    %v204 = vand.u32 %v203, 4294901760
    %v205 = vsub.f32 %v203, %v204
    %v206 = vand.u32 %v205, 4294901760
    %207 = vmatpush1.msra.mxu0 %v206
    %208 = vmatprep.subr.mxu0 0.0
    %v209 = vand.u32 %v58, 4294901760
    %v210 = vsub.f32 %v58, %v209
    %v211 = vand.u32 %v210, 4294901760
    %v212 = vsub.f32 %v210, %v211
    %v213 = vand.u32 %v212, 4294901760
    %214 = vmatpush1.msra.mxu0 %v213
    %215 = vmatprep.subr.mxu0 0.0
    %v216 = vand.u32 %v59, 4294901760
    %v217 = vsub.f32 %v59, %v216
    %v218 = vand.u32 %v217, 4294901760
    %v219 = vsub.f32 %v217, %v218
    %v220 = vand.u32 %v219, 4294901760
    %221 = vmatpush1.msra.mxu0 %v220
    %222 = vmatprep.subr.mxu0 0.0
    %v223 = vand.u32 %v60, 4294901760
    %v224 = vsub.f32 %v60, %v223
    %v225 = vand.u32 %v224, 4294901760
    %v226 = vsub.f32 %v224, %v225
    %v227 = vand.u32 %v226, 4294901760
    %228 = vmatpush1.msra.mxu0 %v227
    %229 = vmatprep.subr.mxu0 0.0
    %v230 = vand.u32 %v61, 4294901760
    %v231 = vsub.f32 %v61, %v230
    %v232 = vand.u32 %v231, 4294901760
    %v233 = vsub.f32 %v231, %v232
    %v234 = vand.u32 %v233, 4294901760
    %235 = vmatpush1.msra.mxu0 %v234
    %236 = vmatprep.subr.mxu0 0.0
    %v237 = vand.u32 %v62, 4294901760
    %v238 = vsub.f32 %v62, %v237
    %v239 = vand.u32 %v238, 4294901760
    %v240 = vsub.f32 %v238, %v239
    %v241 = vand.u32 %v240, 4294901760
    %242 = vmatpush1.msra.mxu0 %v241
    %243 = vmatprep.subr.mxu0 0.0
    %v244 = vand.u32 %v63, 4294901760
    %v245 = vsub.f32 %v63, %v244
    %v246 = vand.u32 %v245, 4294901760
    %v247 = vsub.f32 %v245, %v246
    %v248 = vand.u32 %v247, 4294901760
    %249 = vmatpush1.msra.mxu0 %v248
    %250 = vmatprep.subr.mxu0 0.0
    %v251 = vand.u32 %v64, 4294901760
    %v252 = vsub.f32 %v64, %v251
    %v253 = vand.u32 %v252, 4294901760
    %v254 = vsub.f32 %v252, %v253
    %v255 = vand.u32 %v254, 4294901760
    %256 = vmatpush1.msra.mxu0 %v255
    %257 = vmatprep.subr.mxu0 0.0
    %v258 = vand.u32 %v65, 4294901760
    %v259 = vsub.f32 %v65, %v258
    %v260 = vand.u32 %v259, 4294901760
    %v261 = vsub.f32 %v259, %v260
    %v262 = vand.u32 %v261, 4294901760
    %263 = vmatpush1.msra.mxu0 %v262
    %264 = vmatprep.subr.mxu0 0.0
    %v265 = vand.u32 %v66, 4294901760
    %v266 = vsub.f32 %v66, %v265
    %v267 = vand.u32 %v266, 4294901760
    %v268 = vsub.f32 %v266, %v267
    %v269 = vand.u32 %v268, 4294901760
    %270 = vmatpush1.msra.mxu0 %v269
    %271 = vmatprep.subr.mxu0 0.0
    %v272 = vand.u32 %v67, 4294901760
    %v273 = vsub.f32 %v67, %v272
    %v274 = vand.u32 %v273, 4294901760
    %v275 = vsub.f32 %v273, %v274
    %v276 = vand.u32 %v275, 4294901760
    %277 = vmatpush1.msra.mxu0 %v276
    %278 = vmatprep.subr.mxu0 0.0
    %v279 = vand.u32 %v68, 4294901760
    %v280 = vsub.f32 %v68, %v279
    %v281 = vand.u32 %v280, 4294901760
    %v282 = vsub.f32 %v280, %v281
    %v283 = vand.u32 %v282, 4294901760
    %284 = vmatpush1.msra.mxu0 %v283
    %285 = vmatprep.subr.mxu0 0.0
    %v286 = vand.u32 %v69, 4294901760
    %v287 = vsub.f32 %v69, %v286
    %v288 = vand.u32 %v287, 4294901760
    %v289 = vsub.f32 %v287, %v288
    %v290 = vand.u32 %v289, 4294901760
    %291 = vmatpush1.msra.mxu0 %v290
    %292 = vmatprep.subr.mxu0 0.0
    %v293 = vand.u32 %v70, 4294901760
    %v294 = vsub.f32 %v70, %v293
    %v295 = vand.u32 %v294, 4294901760
    %v296 = vsub.f32 %v294, %v295
    %v297 = vand.u32 %v296, 4294901760
    %298 = vmatpush1.msra.mxu0 %v297
    %299 = vmatprep.subr.mxu0 0.0
    %v300 = vand.u32 %v71, 4294901760
    %v301 = vsub.f32 %v71, %v300
    %v302 = vand.u32 %v301, 4294901760
    %v303 = vsub.f32 %v301, %v302
    %v304 = vand.u32 %v303, 4294901760
    %305 = vmatpush1.msra.mxu0 %v304
    %306 = vmatprep.subr.mxu0 0.0
    %v307 = vand.u32 %v72, 4294901760
    %v308 = vsub.f32 %v72, %v307
    %v309 = vand.u32 %v308, 4294901760
    %v310 = vsub.f32 %v308, %v309
    %v311 = vand.u32 %v310, 4294901760
    %312 = vmatpush1.msra.mxu0 %v311
    %313 = vmatprep.subr.mxu0 0.0
    %v314 = vand.u32 %v73, 4294901760
    %v315 = vsub.f32 %v73, %v314
    %v316 = vand.u32 %v315, 4294901760
    %v317 = vsub.f32 %v315, %v316
    %v318 = vand.u32 %v317, 4294901760
    %319 = vmatpush1.msra.mxu0 %v318
    %320 = vmatprep.subr.mxu0 0.0
    %v321 = vand.u32 %v74, 4294901760
    %v322 = vsub.f32 %v74, %v321
    %v323 = vand.u32 %v322, 4294901760
    %v324 = vsub.f32 %v322, %v323
    %v325 = vand.u32 %v324, 4294901760
    %326 = vmatpush1.msra.mxu0 %v325
    %327 = vmatprep.subr.mxu0 0.0
    %v328 = vand.u32 %v75, 4294901760
    %v329 = vsub.f32 %v75, %v328
    %v330 = vand.u32 %v329, 4294901760
    %v331 = vsub.f32 %v329, %v330
    %v332 = vand.u32 %v331, 4294901760
    %333 = vmatpush1.msra.mxu0 %v332
    %334 = vmatprep.subr.mxu0 0.0
    %v335 = vand.u32 %v76, 4294901760
    %v336 = vsub.f32 %v76, %v335
    %v337 = vand.u32 %v336, 4294901760
    %v338 = vsub.f32 %v336, %v337
    %v339 = vand.u32 %v338, 4294901760
    %340 = vmatpush1.msra.mxu0 %v339
    %341 = vmatprep.subr.mxu0 0.0
    %v342 = vand.u32 %v77, 4294901760
    %v343 = vsub.f32 %v77, %v342
    %v344 = vand.u32 %v343, 4294901760
    %v345 = vsub.f32 %v343, %v344
    %v346 = vand.u32 %v345, 4294901760
    %347 = vmatpush1.msra.mxu0 %v346
    %348 = vmatprep.subr.mxu0 0.0
    %v349 = vand.u32 %v78, 4294901760
    %v350 = vsub.f32 %v78, %v349
    %v351 = vand.u32 %v350, 4294901760
    %v352 = vsub.f32 %v350, %v351
    %v353 = vand.u32 %v352, 4294901760
    %354 = vmatpush1.msra.mxu0 %v353
    %355 = vmatprep.subr.mxu0 0.0
    %v356 = vand.u32 %v79, 4294901760
    %v357 = vsub.f32 %v79, %v356
    %v358 = vand.u32 %v357, 4294901760
    %v359 = vsub.f32 %v357, %v358
    %v360 = vand.u32 %v359, 4294901760
    %361 = vmatpush1.msra.mxu0 %v360
    %362 = vmatprep.subr.mxu0 0.0
    %v363 = vand.u32 %v80, 4294901760
    %v364 = vsub.f32 %v80, %v363
    %v365 = vand.u32 %v364, 4294901760
    %v366 = vsub.f32 %v364, %v365
    %v367 = vand.u32 %v366, 4294901760
    %368 = vmatpush1.msra.mxu0 %v367
    %369 = vmatprep.subr.mxu0 0.0
    %v370 = vand.u32 %v81, 4294901760
    %v371 = vsub.f32 %v81, %v370
    %v372 = vand.u32 %v371, 4294901760
    %v373 = vsub.f32 %v371, %v372
    %v374 = vand.u32 %v373, 4294901760
    %375 = vmatpush1.msra.mxu0 %v374
    %376 = vmatprep.subr.mxu0 0.0
    %v377 = vand.u32 %v82, 4294901760
    %v378 = vsub.f32 %v82, %v377
    %v379 = vand.u32 %v378, 4294901760
    %v380 = vsub.f32 %v378, %v379
    %v381 = vand.u32 %v380, 4294901760
    %382 = vmatpush1.msra.mxu0 %v381
    %383 = vmatprep.subr.mxu0 0.0
    %v384 = vand.u32 %v83, 4294901760
    %v385 = vsub.f32 %v83, %v384
    %v386 = vand.u32 %v385, 4294901760
    %v387 = vsub.f32 %v385, %v386
    %v388 = vand.u32 %v387, 4294901760
    %389 = vmatpush1.msra.mxu0 %v388
    %390 = vmatprep.subr.mxu0 0.0
    %v391 = vand.u32 %v84, 4294901760
    %v392 = vsub.f32 %v84, %v391
    %v393 = vand.u32 %v392, 4294901760
    %v394 = vsub.f32 %v392, %v393
    %v395 = vand.u32 %v394, 4294901760
    %396 = vmatpush1.msra.mxu0 %v395
    %397 = vmatprep.subr.mxu0 0.0
    %v398 = vand.u32 %v85, 4294901760
    %v399 = vsub.f32 %v85, %v398
    %v400 = vand.u32 %v399, 4294901760
    %v401 = vsub.f32 %v399, %v400
    %v402 = vand.u32 %v401, 4294901760
    %403 = vmatpush1.msra.mxu0 %v402
    %404 = vmatprep.subr.mxu0 0.0
    %v405 = vand.u32 %v86, 4294901760
    %v406 = vsub.f32 %v86, %v405
    %v407 = vand.u32 %v406, 4294901760
    %v408 = vsub.f32 %v406, %v407
    %v409 = vand.u32 %v408, 4294901760
    %410 = vmatpush1.msra.mxu0 %v409
    %411 = vmatprep.subr.mxu0 0.0
    %v412 = vand.u32 %v87, 4294901760
    %v413 = vsub.f32 %v87, %v412
    %v414 = vand.u32 %v413, 4294901760
    %v415 = vsub.f32 %v413, %v414
    %v416 = vand.u32 %v415, 4294901760
    %417 = vmatpush1.msra.mxu0 %v416
    %418 = vmatprep.subr.mxu0 0.0
    %v419 = vand.u32 %v88, 4294901760
    %v420 = vsub.f32 %v88, %v419
    %v421 = vand.u32 %v420, 4294901760
    %v422 = vsub.f32 %v420, %v421
    %v423 = vand.u32 %v422, 4294901760
    %424 = vmatpush1.msra.mxu0 %v423
    %v425 = vand.u32 %v56, 4294901760
    %426 = vmatprep.mubr.f32.mxu0 %v425
    %v427 = vand.u32 %v55, 4294901760
    %428 = vmatmul.mubr.f32.gmra.mrb[0].mxu0 %v427
    %v429 = vpop.f32.mrb[0].mxu0
    %v430 = vadd.f32 %v198, %v429
    %v431 = vpop.f32.mrb[0].mxu0
    %432 = vdwg.mxu0
    %433 = vmatprep.subr.mxu0 0.0
    %v434 = vand.u32 %v57, 4294901760
    %v435 = vsub.f32 %v57, %v434
    %436 = vmatpush1.msra.mxu0 %v435
    %437 = vmatprep.subr.mxu0 0.0
    %v438 = vand.u32 %v58, 4294901760
    %v439 = vsub.f32 %v58, %v438
    %440 = vmatpush1.msra.mxu0 %v439
    %441 = vmatprep.subr.mxu0 0.0
    %v442 = vand.u32 %v59, 4294901760
    %v443 = vsub.f32 %v59, %v442
    %444 = vmatpush1.msra.mxu0 %v443
    %445 = vmatprep.subr.mxu0 0.0
    %v446 = vand.u32 %v60, 4294901760
    %v447 = vsub.f32 %v60, %v446
    %448 = vmatpush1.msra.mxu0 %v447
    %449 = vmatprep.subr.mxu0 0.0
    %v450 = vand.u32 %v61, 4294901760
    %v451 = vsub.f32 %v61, %v450
    %452 = vmatpush1.msra.mxu0 %v451
    %453 = vmatprep.subr.mxu0 0.0
    %v454 = vand.u32 %v62, 4294901760
    %v455 = vsub.f32 %v62, %v454
    %456 = vmatpush1.msra.mxu0 %v455
    %457 = vmatprep.subr.mxu0 0.0
    %v458 = vand.u32 %v63, 4294901760
    %v459 = vsub.f32 %v63, %v458
    %460 = vmatpush1.msra.mxu0 %v459
    %461 = vmatprep.subr.mxu0 0.0
    %v462 = vand.u32 %v64, 4294901760
    %v463 = vsub.f32 %v64, %v462
    %464 = vmatpush1.msra.mxu0 %v463
    %465 = vmatprep.subr.mxu0 0.0
    %v466 = vand.u32 %v65, 4294901760
    %v467 = vsub.f32 %v65, %v466
    %468 = vmatpush1.msra.mxu0 %v467
    %469 = vmatprep.subr.mxu0 0.0
    %v470 = vand.u32 %v66, 4294901760
    %v471 = vsub.f32 %v66, %v470
    %472 = vmatpush1.msra.mxu0 %v471
    %473 = vmatprep.subr.mxu0 0.0
    %v474 = vand.u32 %v67, 4294901760
    %v475 = vsub.f32 %v67, %v474
    %476 = vmatpush1.msra.mxu0 %v475
    %477 = vmatprep.subr.mxu0 0.0
    %v478 = vand.u32 %v68, 4294901760
    %v479 = vsub.f32 %v68, %v478
    %480 = vmatpush1.msra.mxu0 %v479
    %481 = vmatprep.subr.mxu0 0.0
    %v482 = vand.u32 %v69, 4294901760
    %v483 = vsub.f32 %v69, %v482
    %484 = vmatpush1.msra.mxu0 %v483
    %485 = vmatprep.subr.mxu0 0.0
    %v486 = vand.u32 %v70, 4294901760
    %v487 = vsub.f32 %v70, %v486
    %488 = vmatpush1.msra.mxu0 %v487
    %489 = vmatprep.subr.mxu0 0.0
    %v490 = vand.u32 %v71, 4294901760
    %v491 = vsub.f32 %v71, %v490
    %492 = vmatpush1.msra.mxu0 %v491
    %493 = vmatprep.subr.mxu0 0.0
    %v494 = vand.u32 %v72, 4294901760
    %v495 = vsub.f32 %v72, %v494
    %496 = vmatpush1.msra.mxu0 %v495
    %497 = vmatprep.subr.mxu0 0.0
    %v498 = vand.u32 %v73, 4294901760
    %v499 = vsub.f32 %v73, %v498
    %500 = vmatpush1.msra.mxu0 %v499
    %501 = vmatprep.subr.mxu0 0.0
    %v502 = vand.u32 %v74, 4294901760
    %v503 = vsub.f32 %v74, %v502
    %504 = vmatpush1.msra.mxu0 %v503
    %505 = vmatprep.subr.mxu0 0.0
    %v506 = vand.u32 %v75, 4294901760
    %v507 = vsub.f32 %v75, %v506
    %508 = vmatpush1.msra.mxu0 %v507
    %509 = vmatprep.subr.mxu0 0.0
    %v510 = vand.u32 %v76, 4294901760
    %v511 = vsub.f32 %v76, %v510
    %512 = vmatpush1.msra.mxu0 %v511
    %513 = vmatprep.subr.mxu0 0.0
    %v514 = vand.u32 %v77, 4294901760
    %v515 = vsub.f32 %v77, %v514
    %516 = vmatpush1.msra.mxu0 %v515
    %517 = vmatprep.subr.mxu0 0.0
    %v518 = vand.u32 %v78, 4294901760
    %v519 = vsub.f32 %v78, %v518
    %520 = vmatpush1.msra.mxu0 %v519
    %521 = vmatprep.subr.mxu0 0.0
    %v522 = vand.u32 %v79, 4294901760
    %v523 = vsub.f32 %v79, %v522
    %524 = vmatpush1.msra.mxu0 %v523
    %525 = vmatprep.subr.mxu0 0.0
    %v526 = vand.u32 %v80, 4294901760
    %v527 = vsub.f32 %v80, %v526
    %528 = vmatpush1.msra.mxu0 %v527
    %529 = vmatprep.subr.mxu0 0.0
    %v530 = vand.u32 %v81, 4294901760
    %v531 = vsub.f32 %v81, %v530
    %532 = vmatpush1.msra.mxu0 %v531
    %533 = vmatprep.subr.mxu0 0.0
    %v534 = vand.u32 %v82, 4294901760
    %v535 = vsub.f32 %v82, %v534
    %536 = vmatpush1.msra.mxu0 %v535
    %537 = vmatprep.subr.mxu0 0.0
    %v538 = vand.u32 %v83, 4294901760
    %v539 = vsub.f32 %v83, %v538
    %540 = vmatpush1.msra.mxu0 %v539
    %541 = vmatprep.subr.mxu0 0.0
    %v542 = vand.u32 %v84, 4294901760
    %v543 = vsub.f32 %v84, %v542
    %544 = vmatpush1.msra.mxu0 %v543
    %545 = vmatprep.subr.mxu0 0.0
    %v546 = vand.u32 %v85, 4294901760
    %v547 = vsub.f32 %v85, %v546
    %548 = vmatpush1.msra.mxu0 %v547
    %549 = vmatprep.subr.mxu0 0.0
    %v550 = vand.u32 %v86, 4294901760
    %v551 = vsub.f32 %v86, %v550
    %552 = vmatpush1.msra.mxu0 %v551
    %553 = vmatprep.subr.mxu0 0.0
    %v554 = vand.u32 %v87, 4294901760
    %v555 = vsub.f32 %v87, %v554
    %556 = vmatpush1.msra.mxu0 %v555
    %557 = vmatprep.subr.mxu0 0.0
    %v558 = vand.u32 %v88, 4294901760
    %v559 = vsub.f32 %v88, %v558
    %560 = vmatpush1.msra.mxu0 %v559
    %v561 = vand.u32 %v56, 4294901760
    %v562 = vsub.f32 %v56, %v561
    %563 = vmatprep.mubr.f32.mxu0 %v562
    %v564 = vand.u32 %v55, 4294901760
    %v565 = vsub.f32 %v55, %v564
    %566 = vmatmul.mubr.f32.gmra.mrb[0].mxu0 %v565
    %v567 = vpop.f32.mrb[0].mxu0
    %v568 = vadd.f32 %v430, %v567
    %v569 = vpop.f32.mrb[0].mxu0
    %570 = vdwg.mxu0
    %571 = vmatprep.subr.mxu0 0.0
    %v572 = vand.u32 %v57, 4294901760
    %573 = vmatpush1.msra.mxu0 %v572
    %574 = vmatprep.subr.mxu0 0.0
    %v575 = vand.u32 %v58, 4294901760
    %576 = vmatpush1.msra.mxu0 %v575
    %577 = vmatprep.subr.mxu0 0.0
    %v578 = vand.u32 %v59, 4294901760
    %579 = vmatpush1.msra.mxu0 %v578
    %580 = vmatprep.subr.mxu0 0.0
    %v581 = vand.u32 %v60, 4294901760
    %582 = vmatpush1.msra.mxu0 %v581
    %583 = vmatprep.subr.mxu0 0.0
    %v584 = vand.u32 %v61, 4294901760
    %585 = vmatpush1.msra.mxu0 %v584
    %586 = vmatprep.subr.mxu0 0.0
    %v587 = vand.u32 %v62, 4294901760
    %588 = vmatpush1.msra.mxu0 %v587
    %589 = vmatprep.subr.mxu0 0.0
    %v590 = vand.u32 %v63, 4294901760
    %591 = vmatpush1.msra.mxu0 %v590
    %592 = vmatprep.subr.mxu0 0.0
    %v593 = vand.u32 %v64, 4294901760
    %594 = vmatpush1.msra.mxu0 %v593
    %595 = vmatprep.subr.mxu0 0.0
    %v596 = vand.u32 %v65, 4294901760
    %597 = vmatpush1.msra.mxu0 %v596
    %598 = vmatprep.subr.mxu0 0.0
    %v599 = vand.u32 %v66, 4294901760
    %600 = vmatpush1.msra.mxu0 %v599
    %601 = vmatprep.subr.mxu0 0.0
    %v602 = vand.u32 %v67, 4294901760
    %603 = vmatpush1.msra.mxu0 %v602
    %604 = vmatprep.subr.mxu0 0.0
    %v605 = vand.u32 %v68, 4294901760
    %606 = vmatpush1.msra.mxu0 %v605
    %607 = vmatprep.subr.mxu0 0.0
    %v608 = vand.u32 %v69, 4294901760
    %609 = vmatpush1.msra.mxu0 %v608
    %610 = vmatprep.subr.mxu0 0.0
    %v611 = vand.u32 %v70, 4294901760
    %612 = vmatpush1.msra.mxu0 %v611
    %613 = vmatprep.subr.mxu0 0.0
    %v614 = vand.u32 %v71, 4294901760
    %615 = vmatpush1.msra.mxu0 %v614
    %616 = vmatprep.subr.mxu0 0.0
    %v617 = vand.u32 %v72, 4294901760
    %618 = vmatpush1.msra.mxu0 %v617
    %619 = vmatprep.subr.mxu0 0.0
    %v620 = vand.u32 %v73, 4294901760
    %621 = vmatpush1.msra.mxu0 %v620
    %622 = vmatprep.subr.mxu0 0.0
    %v623 = vand.u32 %v74, 4294901760
    %624 = vmatpush1.msra.mxu0 %v623
    %625 = vmatprep.subr.mxu0 0.0
    %v626 = vand.u32 %v75, 4294901760
    %627 = vmatpush1.msra.mxu0 %v626
    %628 = vmatprep.subr.mxu0 0.0
    %v629 = vand.u32 %v76, 4294901760
    %630 = vmatpush1.msra.mxu0 %v629
    %631 = vmatprep.subr.mxu0 0.0
    %v632 = vand.u32 %v77, 4294901760
    %633 = vmatpush1.msra.mxu0 %v632
    %634 = vmatprep.subr.mxu0 0.0
    %v635 = vand.u32 %v78, 4294901760
    %636 = vmatpush1.msra.mxu0 %v635
    %637 = vmatprep.subr.mxu0 0.0
    %v638 = vand.u32 %v79, 4294901760
    %639 = vmatpush1.msra.mxu0 %v638
    %640 = vmatprep.subr.mxu0 0.0
    %v641 = vand.u32 %v80, 4294901760
    %642 = vmatpush1.msra.mxu0 %v641
    %643 = vmatprep.subr.mxu0 0.0
    %v644 = vand.u32 %v81, 4294901760
    %645 = vmatpush1.msra.mxu0 %v644
    %646 = vmatprep.subr.mxu0 0.0
    %v647 = vand.u32 %v82, 4294901760
    %648 = vmatpush1.msra.mxu0 %v647
    %649 = vmatprep.subr.mxu0 0.0
    %v650 = vand.u32 %v83, 4294901760
    %651 = vmatpush1.msra.mxu0 %v650
    %652 = vmatprep.subr.mxu0 0.0
    %v653 = vand.u32 %v84, 4294901760
    %654 = vmatpush1.msra.mxu0 %v653
    %655 = vmatprep.subr.mxu0 0.0
    %v656 = vand.u32 %v85, 4294901760
    %657 = vmatpush1.msra.mxu0 %v656
    %658 = vmatprep.subr.mxu0 0.0
    %v659 = vand.u32 %v86, 4294901760
    %660 = vmatpush1.msra.mxu0 %v659
    %661 = vmatprep.subr.mxu0 0.0
    %v662 = vand.u32 %v87, 4294901760
    %663 = vmatpush1.msra.mxu0 %v662
    %664 = vmatprep.subr.mxu0 0.0
    %v665 = vand.u32 %v88, 4294901760
    %666 = vmatpush1.msra.mxu0 %v665
    %v667 = vand.u32 %v56, 4294901760
    %v668 = vsub.f32 %v56, %v667
    %v669 = vand.u32 %v668, 4294901760
    %670 = vmatprep.mubr.f32.mxu0 %v669
    %v671 = vand.u32 %v55, 4294901760
    %v672 = vsub.f32 %v55, %v671
    %v673 = vand.u32 %v672, 4294901760
    %674 = vmatmul.mubr.f32.gmra.mrb[0].mxu0 %v673
    %v675 = vpop.f32.mrb[0].mxu0
    %v676 = vadd.f32 %v568, %v675
    %v677 = vpop.f32.mrb[0].mxu0
    %678 = vdwg.mxu0
    %679 = vmatprep.subr.mxu0 0.0
    %v680 = vand.u32 %v57, 4294901760
    %v681 = vsub.f32 %v57, %v680
    %v682 = vand.u32 %v681, 4294901760
    %683 = vmatpush1.msra.mxu0 %v682
    %684 = vmatprep.subr.mxu0 0.0
    %v685 = vand.u32 %v58, 4294901760
    %v686 = vsub.f32 %v58, %v685
    %v687 = vand.u32 %v686, 4294901760
    %688 = vmatpush1.msra.mxu0 %v687
    %689 = vmatprep.subr.mxu0 0.0
    %v690 = vand.u32 %v59, 4294901760
    %v691 = vsub.f32 %v59, %v690
    %v692 = vand.u32 %v691, 4294901760
    %693 = vmatpush1.msra.mxu0 %v692
    %694 = vmatprep.subr.mxu0 0.0
    %v695 = vand.u32 %v60, 4294901760
    %v696 = vsub.f32 %v60, %v695
    %v697 = vand.u32 %v696, 4294901760
    %698 = vmatpush1.msra.mxu0 %v697
    %699 = vmatprep.subr.mxu0 0.0
    %v700 = vand.u32 %v61, 4294901760
    %v701 = vsub.f32 %v61, %v700
    %v702 = vand.u32 %v701, 4294901760
    %703 = vmatpush1.msra.mxu0 %v702
    %704 = vmatprep.subr.mxu0 0.0
    %v705 = vand.u32 %v62, 4294901760
    %v706 = vsub.f32 %v62, %v705
    %v707 = vand.u32 %v706, 4294901760
    %708 = vmatpush1.msra.mxu0 %v707
    %709 = vmatprep.subr.mxu0 0.0
    %v710 = vand.u32 %v63, 4294901760
    %v711 = vsub.f32 %v63, %v710
    %v712 = vand.u32 %v711, 4294901760
    %713 = vmatpush1.msra.mxu0 %v712
    %714 = vmatprep.subr.mxu0 0.0
    %v715 = vand.u32 %v64, 4294901760
    %v716 = vsub.f32 %v64, %v715
    %v717 = vand.u32 %v716, 4294901760
    %718 = vmatpush1.msra.mxu0 %v717
    %719 = vmatprep.subr.mxu0 0.0
    %v720 = vand.u32 %v65, 4294901760
    %v721 = vsub.f32 %v65, %v720
    %v722 = vand.u32 %v721, 4294901760
    %723 = vmatpush1.msra.mxu0 %v722
    %724 = vmatprep.subr.mxu0 0.0
    %v725 = vand.u32 %v66, 4294901760
    %v726 = vsub.f32 %v66, %v725
    %v727 = vand.u32 %v726, 4294901760
    %728 = vmatpush1.msra.mxu0 %v727
    %729 = vmatprep.subr.mxu0 0.0
    %v730 = vand.u32 %v67, 4294901760
    %v731 = vsub.f32 %v67, %v730
    %v732 = vand.u32 %v731, 4294901760
    %733 = vmatpush1.msra.mxu0 %v732
    %734 = vmatprep.subr.mxu0 0.0
    %v735 = vand.u32 %v68, 4294901760
    %v736 = vsub.f32 %v68, %v735
    %v737 = vand.u32 %v736, 4294901760
    %738 = vmatpush1.msra.mxu0 %v737
    %739 = vmatprep.subr.mxu0 0.0
    %v740 = vand.u32 %v69, 4294901760
    %v741 = vsub.f32 %v69, %v740
    %v742 = vand.u32 %v741, 4294901760
    %743 = vmatpush1.msra.mxu0 %v742
    %744 = vmatprep.subr.mxu0 0.0
    %v745 = vand.u32 %v70, 4294901760
    %v746 = vsub.f32 %v70, %v745
    %v747 = vand.u32 %v746, 4294901760
    %748 = vmatpush1.msra.mxu0 %v747
    %749 = vmatprep.subr.mxu0 0.0
    %v750 = vand.u32 %v71, 4294901760
    %v751 = vsub.f32 %v71, %v750
    %v752 = vand.u32 %v751, 4294901760
    %753 = vmatpush1.msra.mxu0 %v752
    %754 = vmatprep.subr.mxu0 0.0
    %v755 = vand.u32 %v72, 4294901760
    %v756 = vsub.f32 %v72, %v755
    %v757 = vand.u32 %v756, 4294901760
    %758 = vmatpush1.msra.mxu0 %v757
    %759 = vmatprep.subr.mxu0 0.0
    %v760 = vand.u32 %v73, 4294901760
    %v761 = vsub.f32 %v73, %v760
    %v762 = vand.u32 %v761, 4294901760
    %763 = vmatpush1.msra.mxu0 %v762
    %764 = vmatprep.subr.mxu0 0.0
    %v765 = vand.u32 %v74, 4294901760
    %v766 = vsub.f32 %v74, %v765
    %v767 = vand.u32 %v766, 4294901760
    %768 = vmatpush1.msra.mxu0 %v767
    %769 = vmatprep.subr.mxu0 0.0
    %v770 = vand.u32 %v75, 4294901760
    %v771 = vsub.f32 %v75, %v770
    %v772 = vand.u32 %v771, 4294901760
    %773 = vmatpush1.msra.mxu0 %v772
    %774 = vmatprep.subr.mxu0 0.0
    %v775 = vand.u32 %v76, 4294901760
    %v776 = vsub.f32 %v76, %v775
    %v777 = vand.u32 %v776, 4294901760
    %778 = vmatpush1.msra.mxu0 %v777
    %779 = vmatprep.subr.mxu0 0.0
    %v780 = vand.u32 %v77, 4294901760
    %v781 = vsub.f32 %v77, %v780
    %v782 = vand.u32 %v781, 4294901760
    %783 = vmatpush1.msra.mxu0 %v782
    %784 = vmatprep.subr.mxu0 0.0
    %v785 = vand.u32 %v78, 4294901760
    %v786 = vsub.f32 %v78, %v785
    %v787 = vand.u32 %v786, 4294901760
    %788 = vmatpush1.msra.mxu0 %v787
    %789 = vmatprep.subr.mxu0 0.0
    %v790 = vand.u32 %v79, 4294901760
    %v791 = vsub.f32 %v79, %v790
    %v792 = vand.u32 %v791, 4294901760
    %793 = vmatpush1.msra.mxu0 %v792
    %794 = vmatprep.subr.mxu0 0.0
    %v795 = vand.u32 %v80, 4294901760
    %v796 = vsub.f32 %v80, %v795
    %v797 = vand.u32 %v796, 4294901760
    %798 = vmatpush1.msra.mxu0 %v797
    %799 = vmatprep.subr.mxu0 0.0
    %v800 = vand.u32 %v81, 4294901760
    %v801 = vsub.f32 %v81, %v800
    %v802 = vand.u32 %v801, 4294901760
    %803 = vmatpush1.msra.mxu0 %v802
    %804 = vmatprep.subr.mxu0 0.0
    %v805 = vand.u32 %v82, 4294901760
    %v806 = vsub.f32 %v82, %v805
    %v807 = vand.u32 %v806, 4294901760
    %808 = vmatpush1.msra.mxu0 %v807
    %809 = vmatprep.subr.mxu0 0.0
    %v810 = vand.u32 %v83, 4294901760
    %v811 = vsub.f32 %v83, %v810
    %v812 = vand.u32 %v811, 4294901760
    %813 = vmatpush1.msra.mxu0 %v812
    %814 = vmatprep.subr.mxu0 0.0
    %v815 = vand.u32 %v84, 4294901760
    %v816 = vsub.f32 %v84, %v815
    %v817 = vand.u32 %v816, 4294901760
    %818 = vmatpush1.msra.mxu0 %v817
    %819 = vmatprep.subr.mxu0 0.0
    %v820 = vand.u32 %v85, 4294901760
    %v821 = vsub.f32 %v85, %v820
    %v822 = vand.u32 %v821, 4294901760
    %823 = vmatpush1.msra.mxu0 %v822
    %824 = vmatprep.subr.mxu0 0.0
    %v825 = vand.u32 %v86, 4294901760
    %v826 = vsub.f32 %v86, %v825
    %v827 = vand.u32 %v826, 4294901760
    %828 = vmatpush1.msra.mxu0 %v827
    %829 = vmatprep.subr.mxu0 0.0
    %v830 = vand.u32 %v87, 4294901760
    %v831 = vsub.f32 %v87, %v830
    %v832 = vand.u32 %v831, 4294901760
    %833 = vmatpush1.msra.mxu0 %v832
    %834 = vmatprep.subr.mxu0 0.0
    %v835 = vand.u32 %v88, 4294901760
    %v836 = vsub.f32 %v88, %v835
    %v837 = vand.u32 %v836, 4294901760
    %838 = vmatpush1.msra.mxu0 %v837
    %v839 = vand.u32 %v56, 4294901760
    %840 = vmatprep.mubr.f32.mxu0 %v839
    %v841 = vand.u32 %v55, 4294901760
    %842 = vmatmul.mubr.f32.gmra.mrb[0].mxu0 %v841
    %v843 = vpop.f32.mrb[0].mxu0
    %v844 = vadd.f32 %v676, %v843
    %v845 = vpop.f32.mrb[0].mxu0
    %846 = vdwg.mxu0
    %847 = vmatprep.subr.mxu0 0.0
    %v848 = vand.u32 %v57, 4294901760
    %849 = vmatpush1.msra.mxu0 %v848
    %850 = vmatprep.subr.mxu0 0.0
    %v851 = vand.u32 %v58, 4294901760
    %852 = vmatpush1.msra.mxu0 %v851
    %853 = vmatprep.subr.mxu0 0.0
    %v854 = vand.u32 %v59, 4294901760
    %855 = vmatpush1.msra.mxu0 %v854
    %856 = vmatprep.subr.mxu0 0.0
    %v857 = vand.u32 %v60, 4294901760
    %858 = vmatpush1.msra.mxu0 %v857
    %859 = vmatprep.subr.mxu0 0.0
    %v860 = vand.u32 %v61, 4294901760
    %861 = vmatpush1.msra.mxu0 %v860
    %862 = vmatprep.subr.mxu0 0.0
    %v863 = vand.u32 %v62, 4294901760
    %864 = vmatpush1.msra.mxu0 %v863
    %865 = vmatprep.subr.mxu0 0.0
    %v866 = vand.u32 %v63, 4294901760
    %867 = vmatpush1.msra.mxu0 %v866
    %868 = vmatprep.subr.mxu0 0.0
    %v869 = vand.u32 %v64, 4294901760
    %870 = vmatpush1.msra.mxu0 %v869
    %871 = vmatprep.subr.mxu0 0.0
    %v872 = vand.u32 %v65, 4294901760
    %873 = vmatpush1.msra.mxu0 %v872
    %874 = vmatprep.subr.mxu0 0.0
    %v875 = vand.u32 %v66, 4294901760
    %876 = vmatpush1.msra.mxu0 %v875
    %877 = vmatprep.subr.mxu0 0.0
    %v878 = vand.u32 %v67, 4294901760
    %879 = vmatpush1.msra.mxu0 %v878
    %880 = vmatprep.subr.mxu0 0.0
    %v881 = vand.u32 %v68, 4294901760
    %882 = vmatpush1.msra.mxu0 %v881
    %883 = vmatprep.subr.mxu0 0.0
    %v884 = vand.u32 %v69, 4294901760
    %885 = vmatpush1.msra.mxu0 %v884
    %886 = vmatprep.subr.mxu0 0.0
    %v887 = vand.u32 %v70, 4294901760
    %888 = vmatpush1.msra.mxu0 %v887
    %889 = vmatprep.subr.mxu0 0.0
    %v890 = vand.u32 %v71, 4294901760
    %891 = vmatpush1.msra.mxu0 %v890
    %892 = vmatprep.subr.mxu0 0.0
    %v893 = vand.u32 %v72, 4294901760
    %894 = vmatpush1.msra.mxu0 %v893
    %895 = vmatprep.subr.mxu0 0.0
    %v896 = vand.u32 %v73, 4294901760
    %897 = vmatpush1.msra.mxu0 %v896
    %898 = vmatprep.subr.mxu0 0.0
    %v899 = vand.u32 %v74, 4294901760
    %900 = vmatpush1.msra.mxu0 %v899
    %901 = vmatprep.subr.mxu0 0.0
    %v902 = vand.u32 %v75, 4294901760
    %903 = vmatpush1.msra.mxu0 %v902
    %904 = vmatprep.subr.mxu0 0.0
    %v905 = vand.u32 %v76, 4294901760
    %906 = vmatpush1.msra.mxu0 %v905
    %907 = vmatprep.subr.mxu0 0.0
    %v908 = vand.u32 %v77, 4294901760
    %909 = vmatpush1.msra.mxu0 %v908
    %910 = vmatprep.subr.mxu0 0.0
    %v911 = vand.u32 %v78, 4294901760
    %912 = vmatpush1.msra.mxu0 %v911
    %913 = vmatprep.subr.mxu0 0.0
    %v914 = vand.u32 %v79, 4294901760
    %915 = vmatpush1.msra.mxu0 %v914
    %916 = vmatprep.subr.mxu0 0.0
    %v917 = vand.u32 %v80, 4294901760
    %918 = vmatpush1.msra.mxu0 %v917
    %919 = vmatprep.subr.mxu0 0.0
    %v920 = vand.u32 %v81, 4294901760
    %921 = vmatpush1.msra.mxu0 %v920
    %922 = vmatprep.subr.mxu0 0.0
    %v923 = vand.u32 %v82, 4294901760
    %924 = vmatpush1.msra.mxu0 %v923
    %925 = vmatprep.subr.mxu0 0.0
    %v926 = vand.u32 %v83, 4294901760
    %927 = vmatpush1.msra.mxu0 %v926
    %928 = vmatprep.subr.mxu0 0.0
    %v929 = vand.u32 %v84, 4294901760
    %930 = vmatpush1.msra.mxu0 %v929
    %931 = vmatprep.subr.mxu0 0.0
    %v932 = vand.u32 %v85, 4294901760
    %933 = vmatpush1.msra.mxu0 %v932
    %934 = vmatprep.subr.mxu0 0.0
    %v935 = vand.u32 %v86, 4294901760
    %936 = vmatpush1.msra.mxu0 %v935
    %937 = vmatprep.subr.mxu0 0.0
    %v938 = vand.u32 %v87, 4294901760
    %939 = vmatpush1.msra.mxu0 %v938
    %940 = vmatprep.subr.mxu0 0.0
    %v941 = vand.u32 %v88, 4294901760
    %942 = vmatpush1.msra.mxu0 %v941
    %v943 = vand.u32 %v56, 4294901760
    %944 = vmatprep.mubr.f32.mxu0 %v943
    %v945 = vand.u32 %v55, 4294901760
    %946 = vmatmul.mubr.f32.gmra.mrb[0].mxu0 %v945
    %v947 = vpop.f32.mrb[0].mxu0
    %v948 = vadd.f32 %v844, %v947
    %v949 = vpop.f32.mrb[0].mxu0
    %950 = vdwg.mxu0
    %v951 = vmul.f32 %v55, %v55
    %v952 = vmul.f32 %v56, %v56
    %953 = vmatprep.subr.mxu0 0.0
    %v954 = vand.u32 %v57, 4294901760
    %955 = vmatpush1.msra.mxu0 %v954
    %956 = vmatprep.subr.mxu0 0.0
    %v957 = vand.u32 %v58, 4294901760
    %958 = vmatpush1.msra.mxu0 %v957
    %959 = vmatprep.subr.mxu0 0.0
    %v960 = vand.u32 %v59, 4294901760
    %961 = vmatpush1.msra.mxu0 %v960
    %962 = vmatprep.subr.mxu0 0.0
    %v963 = vand.u32 %v60, 4294901760
    %964 = vmatpush1.msra.mxu0 %v963
    %965 = vmatprep.subr.mxu0 0.0
    %v966 = vand.u32 %v61, 4294901760
    %967 = vmatpush1.msra.mxu0 %v966
    %968 = vmatprep.subr.mxu0 0.0
    %v969 = vand.u32 %v62, 4294901760
    %970 = vmatpush1.msra.mxu0 %v969
    %971 = vmatprep.subr.mxu0 0.0
    %v972 = vand.u32 %v63, 4294901760
    %973 = vmatpush1.msra.mxu0 %v972
    %974 = vmatprep.subr.mxu0 0.0
    %v975 = vand.u32 %v64, 4294901760
    %976 = vmatpush1.msra.mxu0 %v975
    %977 = vmatprep.subr.mxu0 0.0
    %v978 = vand.u32 %v65, 4294901760
    %979 = vmatpush1.msra.mxu0 %v978
    %980 = vmatprep.subr.mxu0 0.0
    %v981 = vand.u32 %v66, 4294901760
    %982 = vmatpush1.msra.mxu0 %v981
    %983 = vmatprep.subr.mxu0 0.0
    %v984 = vand.u32 %v67, 4294901760
    %985 = vmatpush1.msra.mxu0 %v984
    %986 = vmatprep.subr.mxu0 0.0
    %v987 = vand.u32 %v68, 4294901760
    %988 = vmatpush1.msra.mxu0 %v987
    %989 = vmatprep.subr.mxu0 0.0
    %v990 = vand.u32 %v69, 4294901760
    %991 = vmatpush1.msra.mxu0 %v990
    %992 = vmatprep.subr.mxu0 0.0
    %v993 = vand.u32 %v70, 4294901760
    %994 = vmatpush1.msra.mxu0 %v993
    %995 = vmatprep.subr.mxu0 0.0
    %v996 = vand.u32 %v71, 4294901760
    %997 = vmatpush1.msra.mxu0 %v996
    %998 = vmatprep.subr.mxu0 0.0
    %v999 = vand.u32 %v72, 4294901760
    %1000 = vmatpush1.msra.mxu0 %v999
    %1001 = vmatprep.subr.mxu0 0.0
    %v1002 = vand.u32 %v73, 4294901760
    %1003 = vmatpush1.msra.mxu0 %v1002
    %1004 = vmatprep.subr.mxu0 0.0
    %v1005 = vand.u32 %v74, 4294901760
    %1006 = vmatpush1.msra.mxu0 %v1005
    %1007 = vmatprep.subr.mxu0 0.0
    %v1008 = vand.u32 %v75, 4294901760
    %1009 = vmatpush1.msra.mxu0 %v1008
    %1010 = vmatprep.subr.mxu0 0.0
    %v1011 = vand.u32 %v76, 4294901760
    %1012 = vmatpush1.msra.mxu0 %v1011
    %1013 = vmatprep.subr.mxu0 0.0
    %v1014 = vand.u32 %v77, 4294901760
    %1015 = vmatpush1.msra.mxu0 %v1014
    %1016 = vmatprep.subr.mxu0 0.0
    %v1017 = vand.u32 %v78, 4294901760
    %1018 = vmatpush1.msra.mxu0 %v1017
    %1019 = vmatprep.subr.mxu0 0.0
    %v1020 = vand.u32 %v79, 4294901760
    %1021 = vmatpush1.msra.mxu0 %v1020
    %1022 = vmatprep.subr.mxu0 0.0
    %v1023 = vand.u32 %v80, 4294901760
    %1024 = vmatpush1.msra.mxu0 %v1023
    %1025 = vmatprep.subr.mxu0 0.0
    %v1026 = vand.u32 %v81, 4294901760
    %1027 = vmatpush1.msra.mxu0 %v1026
    %1028 = vmatprep.subr.mxu0 0.0
    %v1029 = vand.u32 %v82, 4294901760
    %1030 = vmatpush1.msra.mxu0 %v1029
    %1031 = vmatprep.subr.mxu0 0.0
    %v1032 = vand.u32 %v83, 4294901760
    %1033 = vmatpush1.msra.mxu0 %v1032
    %1034 = vmatprep.subr.mxu0 0.0
    %v1035 = vand.u32 %v84, 4294901760
    %1036 = vmatpush1.msra.mxu0 %v1035
    %1037 = vmatprep.subr.mxu0 0.0
    %v1038 = vand.u32 %v85, 4294901760
    %1039 = vmatpush1.msra.mxu0 %v1038
    %1040 = vmatprep.subr.mxu0 0.0
    %v1041 = vand.u32 %v86, 4294901760
    %1042 = vmatpush1.msra.mxu0 %v1041
    %1043 = vmatprep.subr.mxu0 0.0
    %v1044 = vand.u32 %v87, 4294901760
    %1045 = vmatpush1.msra.mxu0 %v1044
    %1046 = vmatprep.subr.mxu0 0.0
    %v1047 = vand.u32 %v88, 4294901760
    %1048 = vmatpush1.msra.mxu0 %v1047
    %v1049 = vand.u32 %v952, 4294901760
    %v1050 = vsub.f32 %v952, %v1049
    %v1051 = vand.u32 %v1050, 4294901760
    %v1052 = vsub.f32 %v1050, %v1051
    %v1053 = vand.u32 %v1052, 4294901760
    %1054 = vmatprep.mubr.f32.mxu0 %v1053
    %v1055 = vand.u32 %v951, 4294901760
    %v1056 = vsub.f32 %v951, %v1055
    %v1057 = vand.u32 %v1056, 4294901760
    %v1058 = vsub.f32 %v1056, %v1057
    %v1059 = vand.u32 %v1058, 4294901760
    %1060 = vmatmul.mubr.f32.gmra.mrb[0].mxu0 %v1059
    %v1061 = vpop.f32.mrb[0].mxu0
    %v1062 = vadd.f32 0.0, %v1061
    %v1063 = vpop.f32.mrb[0].mxu0
    %1064 = vdwg.mxu0
    %1065 = vmatprep.subr.mxu0 0.0
    %v1066 = vand.u32 %v57, 4294901760
    %v1067 = vsub.f32 %v57, %v1066
    %v1068 = vand.u32 %v1067, 4294901760
    %v1069 = vsub.f32 %v1067, %v1068
    %v1070 = vand.u32 %v1069, 4294901760
    %1071 = vmatpush1.msra.mxu0 %v1070
    %1072 = vmatprep.subr.mxu0 0.0
    %v1073 = vand.u32 %v58, 4294901760
    %v1074 = vsub.f32 %v58, %v1073
    %v1075 = vand.u32 %v1074, 4294901760
    %v1076 = vsub.f32 %v1074, %v1075
    %v1077 = vand.u32 %v1076, 4294901760
    %1078 = vmatpush1.msra.mxu0 %v1077
    %1079 = vmatprep.subr.mxu0 0.0
    %v1080 = vand.u32 %v59, 4294901760
    %v1081 = vsub.f32 %v59, %v1080
    %v1082 = vand.u32 %v1081, 4294901760
    %v1083 = vsub.f32 %v1081, %v1082
    %v1084 = vand.u32 %v1083, 4294901760
    %1085 = vmatpush1.msra.mxu0 %v1084
    %1086 = vmatprep.subr.mxu0 0.0
    %v1087 = vand.u32 %v60, 4294901760
    %v1088 = vsub.f32 %v60, %v1087
    %v1089 = vand.u32 %v1088, 4294901760
    %v1090 = vsub.f32 %v1088, %v1089
    %v1091 = vand.u32 %v1090, 4294901760
    %1092 = vmatpush1.msra.mxu0 %v1091
    %1093 = vmatprep.subr.mxu0 0.0
    %v1094 = vand.u32 %v61, 4294901760
    %v1095 = vsub.f32 %v61, %v1094
    %v1096 = vand.u32 %v1095, 4294901760
    %v1097 = vsub.f32 %v1095, %v1096
    %v1098 = vand.u32 %v1097, 4294901760
    %1099 = vmatpush1.msra.mxu0 %v1098
    %1100 = vmatprep.subr.mxu0 0.0
    %v1101 = vand.u32 %v62, 4294901760
    %v1102 = vsub.f32 %v62, %v1101
    %v1103 = vand.u32 %v1102, 4294901760
    %v1104 = vsub.f32 %v1102, %v1103
    %v1105 = vand.u32 %v1104, 4294901760
    %1106 = vmatpush1.msra.mxu0 %v1105
    %1107 = vmatprep.subr.mxu0 0.0
    %v1108 = vand.u32 %v63, 4294901760
    %v1109 = vsub.f32 %v63, %v1108
    %v1110 = vand.u32 %v1109, 4294901760
    %v1111 = vsub.f32 %v1109, %v1110
    %v1112 = vand.u32 %v1111, 4294901760
    %1113 = vmatpush1.msra.mxu0 %v1112
    %1114 = vmatprep.subr.mxu0 0.0
    %v1115 = vand.u32 %v64, 4294901760
    %v1116 = vsub.f32 %v64, %v1115
    %v1117 = vand.u32 %v1116, 4294901760
    %v1118 = vsub.f32 %v1116, %v1117
    %v1119 = vand.u32 %v1118, 4294901760
    %1120 = vmatpush1.msra.mxu0 %v1119
    %1121 = vmatprep.subr.mxu0 0.0
    %v1122 = vand.u32 %v65, 4294901760
    %v1123 = vsub.f32 %v65, %v1122
    %v1124 = vand.u32 %v1123, 4294901760
    %v1125 = vsub.f32 %v1123, %v1124
    %v1126 = vand.u32 %v1125, 4294901760
    %1127 = vmatpush1.msra.mxu0 %v1126
    %1128 = vmatprep.subr.mxu0 0.0
    %v1129 = vand.u32 %v66, 4294901760
    %v1130 = vsub.f32 %v66, %v1129
    %v1131 = vand.u32 %v1130, 4294901760
    %v1132 = vsub.f32 %v1130, %v1131
    %v1133 = vand.u32 %v1132, 4294901760
    %1134 = vmatpush1.msra.mxu0 %v1133
    %1135 = vmatprep.subr.mxu0 0.0
    %v1136 = vand.u32 %v67, 4294901760
    %v1137 = vsub.f32 %v67, %v1136
    %v1138 = vand.u32 %v1137, 4294901760
    %v1139 = vsub.f32 %v1137, %v1138
    %v1140 = vand.u32 %v1139, 4294901760
    %1141 = vmatpush1.msra.mxu0 %v1140
    %1142 = vmatprep.subr.mxu0 0.0
    %v1143 = vand.u32 %v68, 4294901760
    %v1144 = vsub.f32 %v68, %v1143
    %v1145 = vand.u32 %v1144, 4294901760
    %v1146 = vsub.f32 %v1144, %v1145
    %v1147 = vand.u32 %v1146, 4294901760
    %1148 = vmatpush1.msra.mxu0 %v1147
    %1149 = vmatprep.subr.mxu0 0.0
    %v1150 = vand.u32 %v69, 4294901760
    %v1151 = vsub.f32 %v69, %v1150
    %v1152 = vand.u32 %v1151, 4294901760
    %v1153 = vsub.f32 %v1151, %v1152
    %v1154 = vand.u32 %v1153, 4294901760
    %1155 = vmatpush1.msra.mxu0 %v1154
    %1156 = vmatprep.subr.mxu0 0.0
    %v1157 = vand.u32 %v70, 4294901760
    %v1158 = vsub.f32 %v70, %v1157
    %v1159 = vand.u32 %v1158, 4294901760
    %v1160 = vsub.f32 %v1158, %v1159
    %v1161 = vand.u32 %v1160, 4294901760
    %1162 = vmatpush1.msra.mxu0 %v1161
    %1163 = vmatprep.subr.mxu0 0.0
    %v1164 = vand.u32 %v71, 4294901760
    %v1165 = vsub.f32 %v71, %v1164
    %v1166 = vand.u32 %v1165, 4294901760
    %v1167 = vsub.f32 %v1165, %v1166
    %v1168 = vand.u32 %v1167, 4294901760
    %1169 = vmatpush1.msra.mxu0 %v1168
    %1170 = vmatprep.subr.mxu0 0.0
    %v1171 = vand.u32 %v72, 4294901760
    %v1172 = vsub.f32 %v72, %v1171
    %v1173 = vand.u32 %v1172, 4294901760
    %v1174 = vsub.f32 %v1172, %v1173
    %v1175 = vand.u32 %v1174, 4294901760
    %1176 = vmatpush1.msra.mxu0 %v1175
    %1177 = vmatprep.subr.mxu0 0.0
    %v1178 = vand.u32 %v73, 4294901760
    %v1179 = vsub.f32 %v73, %v1178
    %v1180 = vand.u32 %v1179, 4294901760
    %v1181 = vsub.f32 %v1179, %v1180
    %v1182 = vand.u32 %v1181, 4294901760
    %1183 = vmatpush1.msra.mxu0 %v1182
    %1184 = vmatprep.subr.mxu0 0.0
    %v1185 = vand.u32 %v74, 4294901760
    %v1186 = vsub.f32 %v74, %v1185
    %v1187 = vand.u32 %v1186, 4294901760
    %v1188 = vsub.f32 %v1186, %v1187
    %v1189 = vand.u32 %v1188, 4294901760
    %1190 = vmatpush1.msra.mxu0 %v1189
    %1191 = vmatprep.subr.mxu0 0.0
    %v1192 = vand.u32 %v75, 4294901760
    %v1193 = vsub.f32 %v75, %v1192
    %v1194 = vand.u32 %v1193, 4294901760
    %v1195 = vsub.f32 %v1193, %v1194
    %v1196 = vand.u32 %v1195, 4294901760
    %1197 = vmatpush1.msra.mxu0 %v1196
    %1198 = vmatprep.subr.mxu0 0.0
    %v1199 = vand.u32 %v76, 4294901760
    %v1200 = vsub.f32 %v76, %v1199
    %v1201 = vand.u32 %v1200, 4294901760
    %v1202 = vsub.f32 %v1200, %v1201
    %v1203 = vand.u32 %v1202, 4294901760
    %1204 = vmatpush1.msra.mxu0 %v1203
    %1205 = vmatprep.subr.mxu0 0.0
    %v1206 = vand.u32 %v77, 4294901760
    %v1207 = vsub.f32 %v77, %v1206
    %v1208 = vand.u32 %v1207, 4294901760
    %v1209 = vsub.f32 %v1207, %v1208
    %v1210 = vand.u32 %v1209, 4294901760
    %1211 = vmatpush1.msra.mxu0 %v1210
    %1212 = vmatprep.subr.mxu0 0.0
    %v1213 = vand.u32 %v78, 4294901760
    %v1214 = vsub.f32 %v78, %v1213
    %v1215 = vand.u32 %v1214, 4294901760
    %v1216 = vsub.f32 %v1214, %v1215
    %v1217 = vand.u32 %v1216, 4294901760
    %1218 = vmatpush1.msra.mxu0 %v1217
    %1219 = vmatprep.subr.mxu0 0.0
    %v1220 = vand.u32 %v79, 4294901760
    %v1221 = vsub.f32 %v79, %v1220
    %v1222 = vand.u32 %v1221, 4294901760
    %v1223 = vsub.f32 %v1221, %v1222
    %v1224 = vand.u32 %v1223, 4294901760
    %1225 = vmatpush1.msra.mxu0 %v1224
    %1226 = vmatprep.subr.mxu0 0.0
    %v1227 = vand.u32 %v80, 4294901760
    %v1228 = vsub.f32 %v80, %v1227
    %v1229 = vand.u32 %v1228, 4294901760
    %v1230 = vsub.f32 %v1228, %v1229
    %v1231 = vand.u32 %v1230, 4294901760
    %1232 = vmatpush1.msra.mxu0 %v1231
    %1233 = vmatprep.subr.mxu0 0.0
    %v1234 = vand.u32 %v81, 4294901760
    %v1235 = vsub.f32 %v81, %v1234
    %v1236 = vand.u32 %v1235, 4294901760
    %v1237 = vsub.f32 %v1235, %v1236
    %v1238 = vand.u32 %v1237, 4294901760
    %1239 = vmatpush1.msra.mxu0 %v1238
    %1240 = vmatprep.subr.mxu0 0.0
    %v1241 = vand.u32 %v82, 4294901760
    %v1242 = vsub.f32 %v82, %v1241
    %v1243 = vand.u32 %v1242, 4294901760
    %v1244 = vsub.f32 %v1242, %v1243
    %v1245 = vand.u32 %v1244, 4294901760
    %1246 = vmatpush1.msra.mxu0 %v1245
    %1247 = vmatprep.subr.mxu0 0.0
    %v1248 = vand.u32 %v83, 4294901760
    %v1249 = vsub.f32 %v83, %v1248
    %v1250 = vand.u32 %v1249, 4294901760
    %v1251 = vsub.f32 %v1249, %v1250
    %v1252 = vand.u32 %v1251, 4294901760
    %1253 = vmatpush1.msra.mxu0 %v1252
    %1254 = vmatprep.subr.mxu0 0.0
    %v1255 = vand.u32 %v84, 4294901760
    %v1256 = vsub.f32 %v84, %v1255
    %v1257 = vand.u32 %v1256, 4294901760
    %v1258 = vsub.f32 %v1256, %v1257
    %v1259 = vand.u32 %v1258, 4294901760
    %1260 = vmatpush1.msra.mxu0 %v1259
    %1261 = vmatprep.subr.mxu0 0.0
    %v1262 = vand.u32 %v85, 4294901760
    %v1263 = vsub.f32 %v85, %v1262
    %v1264 = vand.u32 %v1263, 4294901760
    %v1265 = vsub.f32 %v1263, %v1264
    %v1266 = vand.u32 %v1265, 4294901760
    %1267 = vmatpush1.msra.mxu0 %v1266
    %1268 = vmatprep.subr.mxu0 0.0
    %v1269 = vand.u32 %v86, 4294901760
    %v1270 = vsub.f32 %v86, %v1269
    %v1271 = vand.u32 %v1270, 4294901760
    %v1272 = vsub.f32 %v1270, %v1271
    %v1273 = vand.u32 %v1272, 4294901760
    %1274 = vmatpush1.msra.mxu0 %v1273
    %1275 = vmatprep.subr.mxu0 0.0
    %v1276 = vand.u32 %v87, 4294901760
    %v1277 = vsub.f32 %v87, %v1276
    %v1278 = vand.u32 %v1277, 4294901760
    %v1279 = vsub.f32 %v1277, %v1278
    %v1280 = vand.u32 %v1279, 4294901760
    %1281 = vmatpush1.msra.mxu0 %v1280
    %1282 = vmatprep.subr.mxu0 0.0
    %v1283 = vand.u32 %v88, 4294901760
    %v1284 = vsub.f32 %v88, %v1283
    %v1285 = vand.u32 %v1284, 4294901760
    %v1286 = vsub.f32 %v1284, %v1285
    %v1287 = vand.u32 %v1286, 4294901760
    %1288 = vmatpush1.msra.mxu0 %v1287
    %v1289 = vand.u32 %v952, 4294901760
    %1290 = vmatprep.mubr.f32.mxu0 %v1289
    %v1291 = vand.u32 %v951, 4294901760
    %1292 = vmatmul.mubr.f32.gmra.mrb[0].mxu0 %v1291
    %v1293 = vpop.f32.mrb[0].mxu0
    %v1294 = vadd.f32 %v1062, %v1293
    %v1295 = vpop.f32.mrb[0].mxu0
    %1296 = vdwg.mxu0
    %1297 = vmatprep.subr.mxu0 0.0
    %v1298 = vand.u32 %v57, 4294901760
    %v1299 = vsub.f32 %v57, %v1298
    %1300 = vmatpush1.msra.mxu0 %v1299
    %1301 = vmatprep.subr.mxu0 0.0
    %v1302 = vand.u32 %v58, 4294901760
    %v1303 = vsub.f32 %v58, %v1302
    %1304 = vmatpush1.msra.mxu0 %v1303
    %1305 = vmatprep.subr.mxu0 0.0
    %v1306 = vand.u32 %v59, 4294901760
    %v1307 = vsub.f32 %v59, %v1306
    %1308 = vmatpush1.msra.mxu0 %v1307
    %1309 = vmatprep.subr.mxu0 0.0
    %v1310 = vand.u32 %v60, 4294901760
    %v1311 = vsub.f32 %v60, %v1310
    %1312 = vmatpush1.msra.mxu0 %v1311
    %1313 = vmatprep.subr.mxu0 0.0
    %v1314 = vand.u32 %v61, 4294901760
    %v1315 = vsub.f32 %v61, %v1314
    %1316 = vmatpush1.msra.mxu0 %v1315
    %1317 = vmatprep.subr.mxu0 0.0
    %v1318 = vand.u32 %v62, 4294901760
    %v1319 = vsub.f32 %v62, %v1318
    %1320 = vmatpush1.msra.mxu0 %v1319
    %1321 = vmatprep.subr.mxu0 0.0
    %v1322 = vand.u32 %v63, 4294901760
    %v1323 = vsub.f32 %v63, %v1322
    %1324 = vmatpush1.msra.mxu0 %v1323
    %1325 = vmatprep.subr.mxu0 0.0
    %v1326 = vand.u32 %v64, 4294901760
    %v1327 = vsub.f32 %v64, %v1326
    %1328 = vmatpush1.msra.mxu0 %v1327
    %1329 = vmatprep.subr.mxu0 0.0
    %v1330 = vand.u32 %v65, 4294901760
    %v1331 = vsub.f32 %v65, %v1330
    %1332 = vmatpush1.msra.mxu0 %v1331
    %1333 = vmatprep.subr.mxu0 0.0
    %v1334 = vand.u32 %v66, 4294901760
    %v1335 = vsub.f32 %v66, %v1334
    %1336 = vmatpush1.msra.mxu0 %v1335
    %1337 = vmatprep.subr.mxu0 0.0
    %v1338 = vand.u32 %v67, 4294901760
    %v1339 = vsub.f32 %v67, %v1338
    %1340 = vmatpush1.msra.mxu0 %v1339
    %1341 = vmatprep.subr.mxu0 0.0
    %v1342 = vand.u32 %v68, 4294901760
    %v1343 = vsub.f32 %v68, %v1342
    %1344 = vmatpush1.msra.mxu0 %v1343
    %1345 = vmatprep.subr.mxu0 0.0
    %v1346 = vand.u32 %v69, 4294901760
    %v1347 = vsub.f32 %v69, %v1346
    %1348 = vmatpush1.msra.mxu0 %v1347
    %1349 = vmatprep.subr.mxu0 0.0
    %v1350 = vand.u32 %v70, 4294901760
    %v1351 = vsub.f32 %v70, %v1350
    %1352 = vmatpush1.msra.mxu0 %v1351
    %1353 = vmatprep.subr.mxu0 0.0
    %v1354 = vand.u32 %v71, 4294901760
    %v1355 = vsub.f32 %v71, %v1354
    %1356 = vmatpush1.msra.mxu0 %v1355
    %1357 = vmatprep.subr.mxu0 0.0
    %v1358 = vand.u32 %v72, 4294901760
    %v1359 = vsub.f32 %v72, %v1358
    %1360 = vmatpush1.msra.mxu0 %v1359
    %1361 = vmatprep.subr.mxu0 0.0
    %v1362 = vand.u32 %v73, 4294901760
    %v1363 = vsub.f32 %v73, %v1362
    %1364 = vmatpush1.msra.mxu0 %v1363
    %1365 = vmatprep.subr.mxu0 0.0
    %v1366 = vand.u32 %v74, 4294901760
    %v1367 = vsub.f32 %v74, %v1366
    %1368 = vmatpush1.msra.mxu0 %v1367
    %1369 = vmatprep.subr.mxu0 0.0
    %v1370 = vand.u32 %v75, 4294901760
    %v1371 = vsub.f32 %v75, %v1370
    %1372 = vmatpush1.msra.mxu0 %v1371
    %1373 = vmatprep.subr.mxu0 0.0
    %v1374 = vand.u32 %v76, 4294901760
    %v1375 = vsub.f32 %v76, %v1374
    %1376 = vmatpush1.msra.mxu0 %v1375
    %1377 = vmatprep.subr.mxu0 0.0
    %v1378 = vand.u32 %v77, 4294901760
    %v1379 = vsub.f32 %v77, %v1378
    %1380 = vmatpush1.msra.mxu0 %v1379
    %1381 = vmatprep.subr.mxu0 0.0
    %v1382 = vand.u32 %v78, 4294901760
    %v1383 = vsub.f32 %v78, %v1382
    %1384 = vmatpush1.msra.mxu0 %v1383
    %1385 = vmatprep.subr.mxu0 0.0
    %v1386 = vand.u32 %v79, 4294901760
    %v1387 = vsub.f32 %v79, %v1386
    %1388 = vmatpush1.msra.mxu0 %v1387
    %1389 = vmatprep.subr.mxu0 0.0
    %v1390 = vand.u32 %v80, 4294901760
    %v1391 = vsub.f32 %v80, %v1390
    %1392 = vmatpush1.msra.mxu0 %v1391
    %1393 = vmatprep.subr.mxu0 0.0
    %v1394 = vand.u32 %v81, 4294901760
    %v1395 = vsub.f32 %v81, %v1394
    %1396 = vmatpush1.msra.mxu0 %v1395
    %1397 = vmatprep.subr.mxu0 0.0
    %v1398 = vand.u32 %v82, 4294901760
    %v1399 = vsub.f32 %v82, %v1398
    %1400 = vmatpush1.msra.mxu0 %v1399
    %1401 = vmatprep.subr.mxu0 0.0
    %v1402 = vand.u32 %v83, 4294901760
    %v1403 = vsub.f32 %v83, %v1402
    %1404 = vmatpush1.msra.mxu0 %v1403
    %1405 = vmatprep.subr.mxu0 0.0
    %v1406 = vand.u32 %v84, 4294901760
    %v1407 = vsub.f32 %v84, %v1406
    %1408 = vmatpush1.msra.mxu0 %v1407
    %1409 = vmatprep.subr.mxu0 0.0
    %v1410 = vand.u32 %v85, 4294901760
    %v1411 = vsub.f32 %v85, %v1410
    %1412 = vmatpush1.msra.mxu0 %v1411
    %1413 = vmatprep.subr.mxu0 0.0
    %v1414 = vand.u32 %v86, 4294901760
    %v1415 = vsub.f32 %v86, %v1414
    %1416 = vmatpush1.msra.mxu0 %v1415
    %1417 = vmatprep.subr.mxu0 0.0
    %v1418 = vand.u32 %v87, 4294901760
    %v1419 = vsub.f32 %v87, %v1418
    %1420 = vmatpush1.msra.mxu0 %v1419
    %1421 = vmatprep.subr.mxu0 0.0
    %v1422 = vand.u32 %v88, 4294901760
    %v1423 = vsub.f32 %v88, %v1422
    %1424 = vmatpush1.msra.mxu0 %v1423
    %v1425 = vand.u32 %v952, 4294901760
    %v1426 = vsub.f32 %v952, %v1425
    %1427 = vmatprep.mubr.f32.mxu0 %v1426
    %v1428 = vand.u32 %v951, 4294901760
    %v1429 = vsub.f32 %v951, %v1428
    %1430 = vmatmul.mubr.f32.gmra.mrb[0].mxu0 %v1429
    %v1431 = vpop.f32.mrb[0].mxu0
    %v1432 = vadd.f32 %v1294, %v1431
    %v1433 = vpop.f32.mrb[0].mxu0
    %1434 = vdwg.mxu0
    %1435 = vmatprep.subr.mxu0 0.0
    %v1436 = vand.u32 %v57, 4294901760
    %1437 = vmatpush1.msra.mxu0 %v1436
    %1438 = vmatprep.subr.mxu0 0.0
    %v1439 = vand.u32 %v58, 4294901760
    %1440 = vmatpush1.msra.mxu0 %v1439
    %1441 = vmatprep.subr.mxu0 0.0
    %v1442 = vand.u32 %v59, 4294901760
    %1443 = vmatpush1.msra.mxu0 %v1442
    %1444 = vmatprep.subr.mxu0 0.0
    %v1445 = vand.u32 %v60, 4294901760
    %1446 = vmatpush1.msra.mxu0 %v1445
    %1447 = vmatprep.subr.mxu0 0.0
    %v1448 = vand.u32 %v61, 4294901760
    %1449 = vmatpush1.msra.mxu0 %v1448
    %1450 = vmatprep.subr.mxu0 0.0
    %v1451 = vand.u32 %v62, 4294901760
    %1452 = vmatpush1.msra.mxu0 %v1451
    %1453 = vmatprep.subr.mxu0 0.0
    %v1454 = vand.u32 %v63, 4294901760
    %1455 = vmatpush1.msra.mxu0 %v1454
    %1456 = vmatprep.subr.mxu0 0.0
    %v1457 = vand.u32 %v64, 4294901760
    %1458 = vmatpush1.msra.mxu0 %v1457
    %1459 = vmatprep.subr.mxu0 0.0
    %v1460 = vand.u32 %v65, 4294901760
    %1461 = vmatpush1.msra.mxu0 %v1460
    %1462 = vmatprep.subr.mxu0 0.0
    %v1463 = vand.u32 %v66, 4294901760
    %1464 = vmatpush1.msra.mxu0 %v1463
    %1465 = vmatprep.subr.mxu0 0.0
    %v1466 = vand.u32 %v67, 4294901760
    %1467 = vmatpush1.msra.mxu0 %v1466
    %1468 = vmatprep.subr.mxu0 0.0
    %v1469 = vand.u32 %v68, 4294901760
    %1470 = vmatpush1.msra.mxu0 %v1469
    %1471 = vmatprep.subr.mxu0 0.0
    %v1472 = vand.u32 %v69, 4294901760
    %1473 = vmatpush1.msra.mxu0 %v1472
    %1474 = vmatprep.subr.mxu0 0.0
    %v1475 = vand.u32 %v70, 4294901760
    %1476 = vmatpush1.msra.mxu0 %v1475
    %1477 = vmatprep.subr.mxu0 0.0
    %v1478 = vand.u32 %v71, 4294901760
    %1479 = vmatpush1.msra.mxu0 %v1478
    %1480 = vmatprep.subr.mxu0 0.0
    %v1481 = vand.u32 %v72, 4294901760
    %1482 = vmatpush1.msra.mxu0 %v1481
    %1483 = vmatprep.subr.mxu0 0.0
    %v1484 = vand.u32 %v73, 4294901760
    %1485 = vmatpush1.msra.mxu0 %v1484
    %1486 = vmatprep.subr.mxu0 0.0
    %v1487 = vand.u32 %v74, 4294901760
    %1488 = vmatpush1.msra.mxu0 %v1487
    %1489 = vmatprep.subr.mxu0 0.0
    %v1490 = vand.u32 %v75, 4294901760
    %1491 = vmatpush1.msra.mxu0 %v1490
    %1492 = vmatprep.subr.mxu0 0.0
    %v1493 = vand.u32 %v76, 4294901760
    %1494 = vmatpush1.msra.mxu0 %v1493
    %1495 = vmatprep.subr.mxu0 0.0
    %v1496 = vand.u32 %v77, 4294901760
    %1497 = vmatpush1.msra.mxu0 %v1496
    %1498 = vmatprep.subr.mxu0 0.0
    %v1499 = vand.u32 %v78, 4294901760
    %1500 = vmatpush1.msra.mxu0 %v1499
    %1501 = vmatprep.subr.mxu0 0.0
    %v1502 = vand.u32 %v79, 4294901760
    %1503 = vmatpush1.msra.mxu0 %v1502
    %1504 = vmatprep.subr.mxu0 0.0
    %v1505 = vand.u32 %v80, 4294901760
    %1506 = vmatpush1.msra.mxu0 %v1505
    %1507 = vmatprep.subr.mxu0 0.0
    %v1508 = vand.u32 %v81, 4294901760
    %1509 = vmatpush1.msra.mxu0 %v1508
    %1510 = vmatprep.subr.mxu0 0.0
    %v1511 = vand.u32 %v82, 4294901760
    %1512 = vmatpush1.msra.mxu0 %v1511
    %1513 = vmatprep.subr.mxu0 0.0
    %v1514 = vand.u32 %v83, 4294901760
    %1515 = vmatpush1.msra.mxu0 %v1514
    %1516 = vmatprep.subr.mxu0 0.0
    %v1517 = vand.u32 %v84, 4294901760
    %1518 = vmatpush1.msra.mxu0 %v1517
    %1519 = vmatprep.subr.mxu0 0.0
    %v1520 = vand.u32 %v85, 4294901760
    %1521 = vmatpush1.msra.mxu0 %v1520
    %1522 = vmatprep.subr.mxu0 0.0
    %v1523 = vand.u32 %v86, 4294901760
    %1524 = vmatpush1.msra.mxu0 %v1523
    %1525 = vmatprep.subr.mxu0 0.0
    %v1526 = vand.u32 %v87, 4294901760
    %1527 = vmatpush1.msra.mxu0 %v1526
    %1528 = vmatprep.subr.mxu0 0.0
    %v1529 = vand.u32 %v88, 4294901760
    %1530 = vmatpush1.msra.mxu0 %v1529
    %v1531 = vand.u32 %v952, 4294901760
    %v1532 = vsub.f32 %v952, %v1531
    %v1533 = vand.u32 %v1532, 4294901760
    %1534 = vmatprep.mubr.f32.mxu0 %v1533
    %v1535 = vand.u32 %v951, 4294901760
    %v1536 = vsub.f32 %v951, %v1535
    %v1537 = vand.u32 %v1536, 4294901760
    %1538 = vmatmul.mubr.f32.gmra.mrb[0].mxu0 %v1537
    %v1539 = vpop.f32.mrb[0].mxu0
    %v1540 = vadd.f32 %v1432, %v1539
    %v1541 = vpop.f32.mrb[0].mxu0
    %1542 = vdwg.mxu0
    %1543 = vmatprep.subr.mxu0 0.0
    %v1544 = vand.u32 %v57, 4294901760
    %v1545 = vsub.f32 %v57, %v1544
    %v1546 = vand.u32 %v1545, 4294901760
    %1547 = vmatpush1.msra.mxu0 %v1546
    %1548 = vmatprep.subr.mxu0 0.0
    %v1549 = vand.u32 %v58, 4294901760
    %v1550 = vsub.f32 %v58, %v1549
    %v1551 = vand.u32 %v1550, 4294901760
    %1552 = vmatpush1.msra.mxu0 %v1551
    %1553 = vmatprep.subr.mxu0 0.0
    %v1554 = vand.u32 %v59, 4294901760
    %v1555 = vsub.f32 %v59, %v1554
    %v1556 = vand.u32 %v1555, 4294901760
    %1557 = vmatpush1.msra.mxu0 %v1556
    %1558 = vmatprep.subr.mxu0 0.0
    %v1559 = vand.u32 %v60, 4294901760
    %v1560 = vsub.f32 %v60, %v1559
    %v1561 = vand.u32 %v1560, 4294901760
    %1562 = vmatpush1.msra.mxu0 %v1561
    %1563 = vmatprep.subr.mxu0 0.0
    %v1564 = vand.u32 %v61, 4294901760
    %v1565 = vsub.f32 %v61, %v1564
    %v1566 = vand.u32 %v1565, 4294901760
    %1567 = vmatpush1.msra.mxu0 %v1566
    %1568 = vmatprep.subr.mxu0 0.0
    %v1569 = vand.u32 %v62, 4294901760
    %v1570 = vsub.f32 %v62, %v1569
    %v1571 = vand.u32 %v1570, 4294901760
    %1572 = vmatpush1.msra.mxu0 %v1571
    %1573 = vmatprep.subr.mxu0 0.0
    %v1574 = vand.u32 %v63, 4294901760
    %v1575 = vsub.f32 %v63, %v1574
    %v1576 = vand.u32 %v1575, 4294901760
    %1577 = vmatpush1.msra.mxu0 %v1576
    %1578 = vmatprep.subr.mxu0 0.0
    %v1579 = vand.u32 %v64, 4294901760
    %v1580 = vsub.f32 %v64, %v1579
    %v1581 = vand.u32 %v1580, 4294901760
    %1582 = vmatpush1.msra.mxu0 %v1581
    %1583 = vmatprep.subr.mxu0 0.0
    %v1584 = vand.u32 %v65, 4294901760
    %v1585 = vsub.f32 %v65, %v1584
    %v1586 = vand.u32 %v1585, 4294901760
    %1587 = vmatpush1.msra.mxu0 %v1586
    %1588 = vmatprep.subr.mxu0 0.0
    %v1589 = vand.u32 %v66, 4294901760
    %v1590 = vsub.f32 %v66, %v1589
    %v1591 = vand.u32 %v1590, 4294901760
    %1592 = vmatpush1.msra.mxu0 %v1591
    %1593 = vmatprep.subr.mxu0 0.0
    %v1594 = vand.u32 %v67, 4294901760
    %v1595 = vsub.f32 %v67, %v1594
    %v1596 = vand.u32 %v1595, 4294901760
    %1597 = vmatpush1.msra.mxu0 %v1596
    %1598 = vmatprep.subr.mxu0 0.0
    %v1599 = vand.u32 %v68, 4294901760
    %v1600 = vsub.f32 %v68, %v1599
    %v1601 = vand.u32 %v1600, 4294901760
    %1602 = vmatpush1.msra.mxu0 %v1601
    %1603 = vmatprep.subr.mxu0 0.0
    %v1604 = vand.u32 %v69, 4294901760
    %v1605 = vsub.f32 %v69, %v1604
    %v1606 = vand.u32 %v1605, 4294901760
    %1607 = vmatpush1.msra.mxu0 %v1606
    %1608 = vmatprep.subr.mxu0 0.0
    %v1609 = vand.u32 %v70, 4294901760
    %v1610 = vsub.f32 %v70, %v1609
    %v1611 = vand.u32 %v1610, 4294901760
    %1612 = vmatpush1.msra.mxu0 %v1611
    %1613 = vmatprep.subr.mxu0 0.0
    %v1614 = vand.u32 %v71, 4294901760
    %v1615 = vsub.f32 %v71, %v1614
    %v1616 = vand.u32 %v1615, 4294901760
    %1617 = vmatpush1.msra.mxu0 %v1616
    %1618 = vmatprep.subr.mxu0 0.0
    %v1619 = vand.u32 %v72, 4294901760
    %v1620 = vsub.f32 %v72, %v1619
    %v1621 = vand.u32 %v1620, 4294901760
    %1622 = vmatpush1.msra.mxu0 %v1621
    %1623 = vmatprep.subr.mxu0 0.0
    %v1624 = vand.u32 %v73, 4294901760
    %v1625 = vsub.f32 %v73, %v1624
    %v1626 = vand.u32 %v1625, 4294901760
    %1627 = vmatpush1.msra.mxu0 %v1626
    %1628 = vmatprep.subr.mxu0 0.0
    %v1629 = vand.u32 %v74, 4294901760
    %v1630 = vsub.f32 %v74, %v1629
    %v1631 = vand.u32 %v1630, 4294901760
    %1632 = vmatpush1.msra.mxu0 %v1631
    %1633 = vmatprep.subr.mxu0 0.0
    %v1634 = vand.u32 %v75, 4294901760
    %v1635 = vsub.f32 %v75, %v1634
    %v1636 = vand.u32 %v1635, 4294901760
    %1637 = vmatpush1.msra.mxu0 %v1636
    %1638 = vmatprep.subr.mxu0 0.0
    %v1639 = vand.u32 %v76, 4294901760
    %v1640 = vsub.f32 %v76, %v1639
    %v1641 = vand.u32 %v1640, 4294901760
    %1642 = vmatpush1.msra.mxu0 %v1641
    %1643 = vmatprep.subr.mxu0 0.0
    %v1644 = vand.u32 %v77, 4294901760
    %v1645 = vsub.f32 %v77, %v1644
    %v1646 = vand.u32 %v1645, 4294901760
    %1647 = vmatpush1.msra.mxu0 %v1646
    %1648 = vmatprep.subr.mxu0 0.0
    %v1649 = vand.u32 %v78, 4294901760
    %v1650 = vsub.f32 %v78, %v1649
    %v1651 = vand.u32 %v1650, 4294901760
    %1652 = vmatpush1.msra.mxu0 %v1651
    %1653 = vmatprep.subr.mxu0 0.0
    %v1654 = vand.u32 %v79, 4294901760
    %v1655 = vsub.f32 %v79, %v1654
    %v1656 = vand.u32 %v1655, 4294901760
    %1657 = vmatpush1.msra.mxu0 %v1656
    %1658 = vmatprep.subr.mxu0 0.0
    %v1659 = vand.u32 %v80, 4294901760
    %v1660 = vsub.f32 %v80, %v1659
    %v1661 = vand.u32 %v1660, 4294901760
    %1662 = vmatpush1.msra.mxu0 %v1661
    %1663 = vmatprep.subr.mxu0 0.0
    %v1664 = vand.u32 %v81, 4294901760
    %v1665 = vsub.f32 %v81, %v1664
    %v1666 = vand.u32 %v1665, 4294901760
    %1667 = vmatpush1.msra.mxu0 %v1666
    %1668 = vmatprep.subr.mxu0 0.0
    %v1669 = vand.u32 %v82, 4294901760
    %v1670 = vsub.f32 %v82, %v1669
    %v1671 = vand.u32 %v1670, 4294901760
    %1672 = vmatpush1.msra.mxu0 %v1671
    %1673 = vmatprep.subr.mxu0 0.0
    %v1674 = vand.u32 %v83, 4294901760
    %v1675 = vsub.f32 %v83, %v1674
    %v1676 = vand.u32 %v1675, 4294901760
    %1677 = vmatpush1.msra.mxu0 %v1676
    %1678 = vmatprep.subr.mxu0 0.0
    %v1679 = vand.u32 %v84, 4294901760
    %v1680 = vsub.f32 %v84, %v1679
    %v1681 = vand.u32 %v1680, 4294901760
    %1682 = vmatpush1.msra.mxu0 %v1681
    %1683 = vmatprep.subr.mxu0 0.0
    %v1684 = vand.u32 %v85, 4294901760
    %v1685 = vsub.f32 %v85, %v1684
    %v1686 = vand.u32 %v1685, 4294901760
    %1687 = vmatpush1.msra.mxu0 %v1686
    %1688 = vmatprep.subr.mxu0 0.0
    %v1689 = vand.u32 %v86, 4294901760
    %v1690 = vsub.f32 %v86, %v1689
    %v1691 = vand.u32 %v1690, 4294901760
    %1692 = vmatpush1.msra.mxu0 %v1691
    %1693 = vmatprep.subr.mxu0 0.0
    %v1694 = vand.u32 %v87, 4294901760
    %v1695 = vsub.f32 %v87, %v1694
    %v1696 = vand.u32 %v1695, 4294901760
    %1697 = vmatpush1.msra.mxu0 %v1696
    %1698 = vmatprep.subr.mxu0 0.0
    %v1699 = vand.u32 %v88, 4294901760
    %v1700 = vsub.f32 %v88, %v1699
    %v1701 = vand.u32 %v1700, 4294901760
    %1702 = vmatpush1.msra.mxu0 %v1701
    %v1703 = vand.u32 %v952, 4294901760
    %1704 = vmatprep.mubr.f32.mxu0 %v1703
    %v1705 = vand.u32 %v951, 4294901760
    %1706 = vmatmul.mubr.f32.gmra.mrb[0].mxu0 %v1705
    %v1707 = vpop.f32.mrb[0].mxu0
    %v1708 = vadd.f32 %v1540, %v1707
    %v1709 = vpop.f32.mrb[0].mxu0
    %1710 = vdwg.mxu0
    %1711 = vmatprep.subr.mxu0 0.0
    %v1712 = vand.u32 %v57, 4294901760
    %1713 = vmatpush1.msra.mxu0 %v1712
    %1714 = vmatprep.subr.mxu0 0.0
    %v1715 = vand.u32 %v58, 4294901760
    %1716 = vmatpush1.msra.mxu0 %v1715
    %1717 = vmatprep.subr.mxu0 0.0
    %v1718 = vand.u32 %v59, 4294901760
    %1719 = vmatpush1.msra.mxu0 %v1718
    %1720 = vmatprep.subr.mxu0 0.0
    %v1721 = vand.u32 %v60, 4294901760
    %1722 = vmatpush1.msra.mxu0 %v1721
    %1723 = vmatprep.subr.mxu0 0.0
    %v1724 = vand.u32 %v61, 4294901760
    %1725 = vmatpush1.msra.mxu0 %v1724
    %1726 = vmatprep.subr.mxu0 0.0
    %v1727 = vand.u32 %v62, 4294901760
    %1728 = vmatpush1.msra.mxu0 %v1727
    %1729 = vmatprep.subr.mxu0 0.0
    %v1730 = vand.u32 %v63, 4294901760
    %1731 = vmatpush1.msra.mxu0 %v1730
    %1732 = vmatprep.subr.mxu0 0.0
    %v1733 = vand.u32 %v64, 4294901760
    %1734 = vmatpush1.msra.mxu0 %v1733
    %1735 = vmatprep.subr.mxu0 0.0
    %v1736 = vand.u32 %v65, 4294901760
    %1737 = vmatpush1.msra.mxu0 %v1736
    %1738 = vmatprep.subr.mxu0 0.0
    %v1739 = vand.u32 %v66, 4294901760
    %1740 = vmatpush1.msra.mxu0 %v1739
    %1741 = vmatprep.subr.mxu0 0.0
    %v1742 = vand.u32 %v67, 4294901760
    %1743 = vmatpush1.msra.mxu0 %v1742
    %1744 = vmatprep.subr.mxu0 0.0
    %v1745 = vand.u32 %v68, 4294901760
    %1746 = vmatpush1.msra.mxu0 %v1745
    %1747 = vmatprep.subr.mxu0 0.0
    %v1748 = vand.u32 %v69, 4294901760
    %1749 = vmatpush1.msra.mxu0 %v1748
    %1750 = vmatprep.subr.mxu0 0.0
    %v1751 = vand.u32 %v70, 4294901760
    %1752 = vmatpush1.msra.mxu0 %v1751
    %1753 = vmatprep.subr.mxu0 0.0
    %v1754 = vand.u32 %v71, 4294901760
    %1755 = vmatpush1.msra.mxu0 %v1754
    %1756 = vmatprep.subr.mxu0 0.0
    %v1757 = vand.u32 %v72, 4294901760
    %1758 = vmatpush1.msra.mxu0 %v1757
    %1759 = vmatprep.subr.mxu0 0.0
    %v1760 = vand.u32 %v73, 4294901760
    %1761 = vmatpush1.msra.mxu0 %v1760
    %1762 = vmatprep.subr.mxu0 0.0
    %v1763 = vand.u32 %v74, 4294901760
    %1764 = vmatpush1.msra.mxu0 %v1763
    %1765 = vmatprep.subr.mxu0 0.0
    %v1766 = vand.u32 %v75, 4294901760
    %1767 = vmatpush1.msra.mxu0 %v1766
    %1768 = vmatprep.subr.mxu0 0.0
    %v1769 = vand.u32 %v76, 4294901760
    %1770 = vmatpush1.msra.mxu0 %v1769
    %1771 = vmatprep.subr.mxu0 0.0
    %v1772 = vand.u32 %v77, 4294901760
    %1773 = vmatpush1.msra.mxu0 %v1772
    %1774 = vmatprep.subr.mxu0 0.0
    %v1775 = vand.u32 %v78, 4294901760
    %1776 = vmatpush1.msra.mxu0 %v1775
    %1777 = vmatprep.subr.mxu0 0.0
    %v1778 = vand.u32 %v79, 4294901760
    %1779 = vmatpush1.msra.mxu0 %v1778
    %1780 = vmatprep.subr.mxu0 0.0
    %v1781 = vand.u32 %v80, 4294901760
    %1782 = vmatpush1.msra.mxu0 %v1781
    %1783 = vmatprep.subr.mxu0 0.0
    %v1784 = vand.u32 %v81, 4294901760
    %1785 = vmatpush1.msra.mxu0 %v1784
    %1786 = vmatprep.subr.mxu0 0.0
    %v1787 = vand.u32 %v82, 4294901760
    %1788 = vmatpush1.msra.mxu0 %v1787
    %1789 = vmatprep.subr.mxu0 0.0
    %v1790 = vand.u32 %v83, 4294901760
    %1791 = vmatpush1.msra.mxu0 %v1790
    %1792 = vmatprep.subr.mxu0 0.0
    %v1793 = vand.u32 %v84, 4294901760
    %1794 = vmatpush1.msra.mxu0 %v1793
    %1795 = vmatprep.subr.mxu0 0.0
    %v1796 = vand.u32 %v85, 4294901760
    %1797 = vmatpush1.msra.mxu0 %v1796
    %1798 = vmatprep.subr.mxu0 0.0
    %v1799 = vand.u32 %v86, 4294901760
    %1800 = vmatpush1.msra.mxu0 %v1799
    %1801 = vmatprep.subr.mxu0 0.0
    %v1802 = vand.u32 %v87, 4294901760
    %1803 = vmatpush1.msra.mxu0 %v1802
    %1804 = vmatprep.subr.mxu0 0.0
    %v1805 = vand.u32 %v88, 4294901760
    %1806 = vmatpush1.msra.mxu0 %v1805
    %v1807 = vand.u32 %v952, 4294901760
    %1808 = vmatprep.mubr.f32.mxu0 %v1807
    %v1809 = vand.u32 %v951, 4294901760
    %1810 = vmatmul.mubr.f32.gmra.mrb[0].mxu0 %v1809
    %v1811 = vpop.f32.mrb[0].mxu0
    %v1812 = vadd.f32 %v1708, %v1811
    %v1813 = vpop.f32.mrb[0].mxu0
    %1814 = vdwg.mxu0
    %v1815 = vmul.f32 %v948, %v948
    %v1816 = vsub.f32 %v1815, %v1812
    %1817 = vadd.xlane.f32.xlu0 %v1816
    %v1818 = vpop.xlane.xlu0 %1817
    %v1819 = vmul.f32 %v1818, 0.5
    %v1820 = vld [vmem:[#allocation5] sm:$0xff]
    %vm1821 = vcmask 64512
    %v1822 = vsel %vm1821, %v1820, 0.0
    %1823 = vadd.xlane.f32.xlu0 %v1822
    %v1824 = vpop.xlane.xlu0 %1823
    %s1825 = sld [smem:[#allocation2]]
    %v1826 = vstv %s1825
    %v1827 = vadd.f32 %v1824, %v1826
    %v1828 = vadd.f32 %v1819, %v1827
    %vm1829 = vcmask 7168
    %1830 = vst.msk [vmem:[%s4] sm:$0xff] %vm1829, %v1828
    // Predicated region
    $region30: #{tpu_custom_call.1} parent=1 // pred_check
      _
    $region31: #{tpu_custom_call.1} parent=1 // pred_check_branch
      %1832 = sbr.rel (0) target = $region33
    $region32: #{tpu_custom_call.1} parent=1 // pred_region
      _
    $region33: #{tpu_custom_call.1} parent=1 // pred_fallthru
      _
    // Predicated region
    $region34: #{tpu_custom_call.1} parent=1 // pred_check
      _
    $region35: #{tpu_custom_call.1} parent=1 // pred_check_branch
      %1834 = sbr.rel (0) target = $region37
    $region36: #{tpu_custom_call.1} parent=1 // pred_region
      _
    $region37: #{tpu_custom_call.1} parent=1 // pred_fallthru
      _
    %1835 = vsyncpa [#allocation4], 1
    %1836 = vsyncpa [#allocation6], 1

</llo_original>
